<compile_context>
chip_gen: v5e
topology: v5e:2x2
jax: 0.10.0
libtpu: 0.0.40
codegen_flags: <defaults>
</compile_context>

<pallas_src>
from functools import partial

import jax
import jax.numpy as jnp
from jax.experimental import pallas as pl
from jax.experimental.pallas import tpu as pltpu

# ---------------- small model config (consistent with ModelArgs) ----------------
DIM = 64
N_HEADS = 4
N_KV_HEADS = 2
HEAD_DIM = DIM // N_HEADS            # 16
N_REP = N_HEADS // N_KV_HEADS        # 2
MULTIPLE_OF = 32
NORM_EPS = 1e-5
ROPE_THETA = 500000.0


def ffn_hidden_dim(dim, multiple_of):
    hidden = int(2 * (4 * dim) / 3)
    return multiple_of * ((hidden + multiple_of - 1) // multiple_of)


HIDDEN_DIM = ffn_hidden_dim(DIM, MULTIPLE_OF)                 # 192
HIDDEN_PAD = ((HIDDEN_DIM + 127) // 128) * 128                # 256 (lane-aligned)
QKV_WIDTH = (N_HEADS + 2 * N_KV_HEADS) * HEAD_DIM             # 128


# =============================== fused Pallas kernel ===============================

def _block_kernel(x_ref, attn_nw_ref, ffn_nw_ref,
                  wqe_ref, wqo_ref, wke_ref, wko_ref, wv_ref, wo_ref,
                  cos_ref, sin_ref, w13_ref, w2_ref, o_ref,
                  *, B, S, H, KVH, Dh, eps, hidden_pad):
    """Whole TransformerBlock forward for a (B*S, D) tile resident in VMEM.

    Weight layouts (prepared offline, exact):
      wqe/wqo : (H,   D, Dh/2)  per-head even/odd RoPE-partner columns, 1/sqrt(Dh) folded in
      wke/wko : (KVH, D, Dh/2)  same split for K (no scale)
      wv      : (KVH, D, Dh)
      wo      : (H,  Dh, D)     row blocks of the original wo
      cos/sin : (S, Dh/2)       rotary tables (no batch broadcast)
      w13     : (D, 2*hidden_pad)  [w1 | w3] zero-padded hidden
      w2      : (hidden_pad, D)    zero-padded rows
    """
    f32 = jnp.float32
    N = B * S
    half = Dh // 2
    n_rep = H // KVH

    x = x_ref[...].astype(f32)                                       # (N, D)
    D = x.shape[-1]

    # ---------------- attention RMSNorm ----------------
    ms = jnp.mean(x * x, axis=-1, keepdims=True)
    xn = x * jax.lax.rsqrt(ms + eps) * attn_nw_ref[...]              # (N, D)

    # Rotary tables, broadcast over batch in-kernel (tables are (S, half)).
    cos = cos_ref[...][None]                                         # (1, S, half)
    sin = sin_ref[...][None]

    # Causal mask (S x S only), dtype-aware fill value.
    neg = jnp.finfo(f32).min
    row = jax.lax.broadcasted_iota(jnp.int32, (S, S), 0)
    col = jax.lax.broadcasted_iota(jnp.int32, (S, S), 1)
    causal = (col <= row)[None]                                      # (1, S, S)

    # ---------------- K / V projections per kv-head (+ RoPE on K) ----------------
    k_rot = []                                                       # [(kre, kro)] per kv-head
    v_all = []                                                       # [v]          per kv-head
    for g in range(KVH):
        ke = jnp.dot(xn, wke_ref[g], preferred_element_type=f32).reshape(B, S, half)
        ko = jnp.dot(xn, wko_ref[g], preferred_element_type=f32).reshape(B, S, half)
        k_rot.append((ke * cos - ko * sin, ko * cos + ke * sin))
        v_all.append(jnp.dot(xn, wv_ref[g], preferred_element_type=f32).reshape(B, S, Dh))

    # ---------------- per-head attention, wo accumulated across heads ----------------
    attn = jnp.zeros((N, D), f32)
    for h in range(H):
        qe = jnp.dot(xn, wqe_ref[h], preferred_element_type=f32).reshape(B, S, half)
        qo = jnp.dot(xn, wqo_ref[h], preferred_element_type=f32).reshape(B, S, half)
        qre = qe * cos - qo * sin                                    # RoPE (1/sqrt(Dh) folded)
        qro = qo * cos + qe * sin
        kre, kro = k_rot[h // n_rep]                                 # repeat_kv mapping
        # Per-(batch, head) scores: q.k over Dh = even-part dot + odd-part dot.
        scores = (jnp.einsum('bqd,bkd->bqk', qre, kre, preferred_element_type=f32)
                  + jnp.einsum('bqd,bkd->bqk', qro, kro, preferred_element_type=f32))
        scores = jnp.where(causal, scores, neg)                      # (B, S, S)
        m = jnp.max(scores, axis=-1, keepdims=True)
        p = jnp.exp(scores - m)
        p = p * pl.reciprocal(jnp.sum(p, axis=-1, keepdims=True), approx=True)
        ctx = jnp.einsum('bqk,bkd->bqd', p, v_all[h // n_rep],
                         preferred_element_type=f32)                 # (B, S, Dh)
        # sum_h ctx_h @ wo_h  ==  concat_h(ctx_h) @ wo   (exact, no concat needed)
        attn = attn + jnp.dot(ctx.reshape(N, Dh), wo_ref[h],
                              preferred_element_type=f32)            # (N, D)

    h1 = x + attn                                                    # first residual

    # ---------------- FFN: RMSNorm + SwiGLU (fused w1|w3, padded) + w2 + residual ----------------
    ms2 = jnp.mean(h1 * h1, axis=-1, keepdims=True)
    hn = h1 * jax.lax.rsqrt(ms2 + eps) * ffn_nw_ref[...]
    u = jnp.dot(hn, w13_ref[...], preferred_element_type=f32)        # (N, 2*hidden_pad)
    u1 = u[:, :hidden_pad]
    u3 = u[:, hidden_pad:]
    g = (u1 * jax.nn.sigmoid(u1)) * u3                               # padded cols stay exactly 0
    out = h1 + jnp.dot(g, w2_ref[...], preferred_element_type=f32)

    o_ref[...] = out.astype(o_ref.dtype)


# =============================== wrapper ===============================

def _cost_estimate(B, S):
    N = B * S
    flops = 2 * N * DIM * QKV_WIDTH                                   # QKV projections
    flops += 2 * 2 * N_HEADS * B * S * S * HEAD_DIM                   # scores + context
    flops += 2 * N * DIM * DIM                                        # wo
    flops += 2 * N * DIM * (2 * HIDDEN_PAD) + 2 * N * HIDDEN_PAD * DIM  # FFN
    trans = N_HEADS * B * S * S + N * HIDDEN_PAD + 2 * N              # exp + sigmoid + rsqrt
    bytes_accessed = 4 * (2 * N * DIM + 2 * DIM + DIM * QKV_WIDTH + DIM * DIM
                          + 2 * S * (HEAD_DIM // 2)
                          + DIM * 2 * HIDDEN_PAD + HIDDEN_PAD * DIM)
    return pl.CostEstimate(flops=int(flops), transcendentals=int(trans),
                           bytes_accessed=int(bytes_accessed))


def transformer_block(prep, x):
    """x: (B, S, DIM) f32 -> (B, S, DIM) f32. Single fused pallas_call."""
    B, S, D = x.shape
    N = B * S
    x2d = x.reshape(N, D)
    kernel = partial(_block_kernel, B=B, S=S, H=N_HEADS, KVH=N_KV_HEADS,
                     Dh=HEAD_DIM, eps=NORM_EPS, hidden_pad=HIDDEN_PAD)
    out2d = pl.pallas_call(
        kernel,
        out_shape=jax.ShapeDtypeStruct((N, D), jnp.float32),
        compiler_params=pltpu.CompilerParams(vmem_limit_bytes=32 * 1024 * 1024),
        cost_estimate=_cost_estimate(B, S),
    )(x2d, prep['attn_norm_w'], prep['ffn_norm_w'],
      prep['wqe'], prep['wqo'], prep['wke'], prep['wko'], prep['wv'],
      prep['wo'], prep['rope_cos'], prep['rope_sin'],
      prep['w13'], prep['w2'])
    return out2d.reshape(B, S, D)


# ====================== one-time parameter / table preparation ======================

def init_params(key):
    ks = jax.random.split(key, 7)
    scale = 0.02
    return {
        'attn_norm_w': jnp.ones((DIM,), jnp.float32),
        'ffn_norm_w': jnp.ones((DIM,), jnp.float32),
        'wq': scale * jax.random.normal(ks[0], (DIM, N_HEADS * HEAD_DIM), jnp.float32),
        'wk': scale * jax.random.normal(ks[1], (DIM, N_KV_HEADS * HEAD_DIM), jnp.float32),
        'wv': scale * jax.random.normal(ks[2], (DIM, N_KV_HEADS * HEAD_DIM), jnp.float32),
        'wo': scale * jax.random.normal(ks[3], (N_HEADS * HEAD_DIM, DIM), jnp.float32),
        'w1': scale * jax.random.normal(ks[4], (DIM, HIDDEN_DIM), jnp.float32),
        'w3': scale * jax.random.normal(ks[5], (DIM, HIDDEN_DIM), jnp.float32),
        'w2': scale * jax.random.normal(ks[6], (HIDDEN_DIM, DIM), jnp.float32),
    }


def prepare_params(raw, S):
    """Offline weight re-layout; exact and done once outside the hot path."""
    Dh, H, KVH = HEAD_DIM, N_HEADS, N_KV_HEADS
    half = Dh // 2

    def head_halves(w, n_heads, scale=1.0):
        # w: (D, n_heads*Dh); within each head, columns are interleaved RoPE (even, odd) pairs.
        d_in = w.shape[0]
        w4 = (w * scale).reshape(d_in, n_heads, half, 2)
        we = jnp.transpose(w4[..., 0], (1, 0, 2))        # (n_heads, D, half) even / "real"
        wo_ = jnp.transpose(w4[..., 1], (1, 0, 2))       # (n_heads, D, half) odd  / "imag"
        return we, wo_

    wqe, wqo = head_halves(raw['wq'], H, scale=Dh ** -0.5)   # fold 1/sqrt(Dh) into wq
    wke, wko = head_halves(raw['wk'], KVH)
    wv_h = jnp.transpose(raw['wv'].reshape(DIM, KVH, Dh), (1, 0, 2))    # (KVH, D, Dh)
    wo_h = raw['wo'].reshape(H, Dh, DIM)                                 # (H, Dh, D)

    # Rotary tables, sequence-indexed only (no batch broadcast): (S, half).
    freqs = 1.0 / (ROPE_THETA ** (jnp.arange(0, Dh, 2, dtype=jnp.float32) / Dh))
    ang = jnp.outer(jnp.arange(S, dtype=jnp.float32), freqs)
    rope_cos = jnp.cos(ang)
    rope_sin = jnp.sin(ang)

    # FFN: pad hidden 192 -> 256 with zeros (exact) and fuse w1|w3 -> (DIM, 512).
    pad = HIDDEN_PAD - HIDDEN_DIM
    w1p = jnp.pad(raw['w1'], ((0, 0), (0, pad)))
    w3p = jnp.pad(raw['w3'], ((0, 0), (0, pad)))
    w13 = jnp.concatenate([w1p, w3p], axis=1)
    w2p = jnp.pad(raw['w2'], ((0, pad), (0, 0)))

    return {
        'attn_norm_w': raw['attn_norm_w'].reshape(1, DIM),
        'ffn_norm_w': raw['ffn_norm_w'].reshape(1, DIM),
        'wqe': wqe, 'wqo': wqo, 'wke': wke, 'wko': wko,
        'wv': wv_h, 'wo': wo_h,
        'rope_cos': rope_cos, 'rope_sin': rope_sin,
        'w13': w13, 'w2': w2p,
    }


if __name__ == "__main__":
    B, S = 2, 8
    key = jax.random.PRNGKey(0)
    kx, kp = jax.random.split(key)
    x = jax.random.normal(kx, (B, S, DIM), jnp.float32)
    raw = init_params(kp)
    prep = prepare_params(raw, S)

    fwd = jax.jit(transformer_block)
    out = jax.block_until_ready(fwd(prep, x))

    assert out.shape == (B, S, DIM)
    assert bool(jnp.all(jnp.isfinite(out)))
    print("KERNEL_OK")
</pallas_src>

<mosaic_0001>
module attributes {stable_mosaic.version = 11 : i64} {
  func.func @_block_kernel(%arg0: memref<16x64xf32, #tpu.memory_space<vmem>>, %arg1: memref<1x64xf32, #tpu.memory_space<vmem>>, %arg2: memref<1x64xf32, #tpu.memory_space<vmem>>, %arg3: memref<4x64x8xf32, #tpu.memory_space<vmem>>, %arg4: memref<4x64x8xf32, #tpu.memory_space<vmem>>, %arg5: memref<2x64x8xf32, #tpu.memory_space<vmem>>, %arg6: memref<2x64x8xf32, #tpu.memory_space<vmem>>, %arg7: memref<2x64x16xf32, #tpu.memory_space<vmem>>, %arg8: memref<4x16x64xf32, #tpu.memory_space<vmem>>, %arg9: memref<8x8xf32, #tpu.memory_space<vmem>>, %arg10: memref<8x8xf32, #tpu.memory_space<vmem>>, %arg11: memref<64x512xf32, #tpu.memory_space<vmem>>, %arg12: memref<256x64xf32, #tpu.memory_space<vmem>>, %arg13: memref<16x64xf32, #tpu.memory_space<vmem>>) attributes {dimension_semantics = [], scalar_prefetch = 0 : i64, scratch_operands = 0 : i64, tpu.core_type = #tpu.core_type<tc>} {
    %c0 = arith.constant 0 : index
    %c0_0 = arith.constant 0 : index
    %0 = vector.load %arg0[%c0, %c0_0] : memref<16x64xf32, #tpu.memory_space<vmem>>, vector<16x64xf32>
    %1 = arith.mulf %0, %0 : vector<16x64xf32>
    %cst = arith.constant dense<0.000000e+00> : vector<16xf32>
    %2 = vector.multi_reduction <add>, %1, %cst [1] : vector<16x64xf32> to vector<16xf32>
    %3 = vector.shape_cast %2 : vector<16xf32> to vector<16x1xf32>
    %cst_1 = arith.constant 6.400000e+01 : f32
    %4 = vector.broadcast %cst_1 : f32 to vector<16x1xf32>
    %5 = arith.divf %3, %4 : vector<16x1xf32>
    %cst_2 = arith.constant 9.99999974E-6 : f32
    %6 = vector.broadcast %cst_2 : f32 to vector<16x1xf32>
    %7 = arith.addf %5, %6 : vector<16x1xf32>
    %8 = math.rsqrt %7 : vector<16x1xf32>
    %9 = vector.broadcast %8 : vector<16x1xf32> to vector<16x64xf32>
    %10 = arith.mulf %0, %9 : vector<16x64xf32>
    %c0_3 = arith.constant 0 : index
    %c0_4 = arith.constant 0 : index
    %11 = vector.load %arg1[%c0_3, %c0_4] : memref<1x64xf32, #tpu.memory_space<vmem>>, vector<1x64xf32>
    %12 = vector.broadcast %11 : vector<1x64xf32> to vector<16x64xf32>
    %13 = arith.mulf %10, %12 : vector<16x64xf32>
    %c0_5 = arith.constant 0 : index
    %c0_6 = arith.constant 0 : index
    %14 = vector.load %arg9[%c0_5, %c0_6] : memref<8x8xf32, #tpu.memory_space<vmem>>, vector<8x8xf32>
    %15 = vector.shape_cast %14 : vector<8x8xf32> to vector<1x8x8xf32>
    %c0_7 = arith.constant 0 : index
    %c0_8 = arith.constant 0 : index
    %16 = vector.load %arg10[%c0_7, %c0_8] : memref<8x8xf32, #tpu.memory_space<vmem>>, vector<8x8xf32>
    %17 = vector.shape_cast %16 : vector<8x8xf32> to vector<1x8x8xf32>
    %18 = tpu.iota {dimensions = array<i32: 0>} : vector<8x8xi32>
    %19 = tpu.iota {dimensions = array<i32: 1>} : vector<8x8xi32>
    %20 = arith.cmpi sle, %19, %18 : vector<8x8xi32>
    %21 = vector.shape_cast %20 : vector<8x8xi1> to vector<1x8x8xi1>
    %c0_9 = arith.constant 0 : index
    %c0_10 = arith.constant 0 : index
    %c0_11 = arith.constant 0 : index
    %22 = vector.load %arg5[%c0_9, %c0_10, %c0_11] : memref<2x64x8xf32, #tpu.memory_space<vmem>>, vector<1x64x8xf32>
    %23 = vector.shape_cast %22 : vector<1x64x8xf32> to vector<64x8xf32>
    %cst_12 = arith.constant dense<0.000000e+00> : vector<16x8xf32>
    %24 = tpu.matmul %13, %23, %cst_12 {dimension_numbers = #tpu.dot_dimension_numbers<[1], [0], [0], [1], [0, 0, 1, 1], [], []>} : vector<16x64xf32>, vector<64x8xf32>, vector<16x8xf32> -> vector<16x8xf32>
    %25 = vector.shape_cast %24 : vector<16x8xf32> to vector<2x8x8xf32>
    %c0_13 = arith.constant 0 : index
    %c0_14 = arith.constant 0 : index
    %c0_15 = arith.constant 0 : index
    %26 = vector.load %arg6[%c0_13, %c0_14, %c0_15] : memref<2x64x8xf32, #tpu.memory_space<vmem>>, vector<1x64x8xf32>
    %27 = vector.shape_cast %26 : vector<1x64x8xf32> to vector<64x8xf32>
    %cst_16 = arith.constant dense<0.000000e+00> : vector<16x8xf32>
    %28 = tpu.matmul %13, %27, %cst_16 {dimension_numbers = #tpu.dot_dimension_numbers<[1], [0], [0], [1], [0, 0, 1, 1], [], []>} : vector<16x64xf32>, vector<64x8xf32>, vector<16x8xf32> -> vector<16x8xf32>
    %29 = vector.shape_cast %28 : vector<16x8xf32> to vector<2x8x8xf32>
    %30 = vector.broadcast %15 : vector<1x8x8xf32> to vector<2x8x8xf32>
    %31 = arith.mulf %25, %30 : vector<2x8x8xf32>
    %32 = vector.broadcast %17 : vector<1x8x8xf32> to vector<2x8x8xf32>
    %33 = arith.mulf %29, %32 : vector<2x8x8xf32>
    %34 = arith.subf %31, %33 : vector<2x8x8xf32>
    %35 = vector.broadcast %15 : vector<1x8x8xf32> to vector<2x8x8xf32>
    %36 = arith.mulf %29, %35 : vector<2x8x8xf32>
    %37 = vector.broadcast %17 : vector<1x8x8xf32> to vector<2x8x8xf32>
    %38 = arith.mulf %25, %37 : vector<2x8x8xf32>
    %39 = arith.addf %36, %38 : vector<2x8x8xf32>
    %c0_17 = arith.constant 0 : index
    %c0_18 = arith.constant 0 : index
    %c0_19 = arith.constant 0 : index
    %40 = vector.load %arg7[%c0_17, %c0_18, %c0_19] : memref<2x64x16xf32, #tpu.memory_space<vmem>>, vector<1x64x16xf32>
    %41 = vector.shape_cast %40 : vector<1x64x16xf32> to vector<64x16xf32>
    %cst_20 = arith.constant dense<0.000000e+00> : vector<16x16xf32>
    %42 = tpu.matmul %13, %41, %cst_20 {dimension_numbers = #tpu.dot_dimension_numbers<[1], [0], [0], [1], [0, 0, 1, 1], [], []>} : vector<16x64xf32>, vector<64x16xf32>, vector<16x16xf32> -> vector<16x16xf32>
    %43 = vector.shape_cast %42 : vector<16x16xf32> to vector<2x8x16xf32>
    %c1 = arith.constant 1 : index
    %c0_21 = arith.constant 0 : index
    %c0_22 = arith.constant 0 : index
    %44 = vector.load %arg5[%c1, %c0_21, %c0_22] : memref<2x64x8xf32, #tpu.memory_space<vmem>>, vector<1x64x8xf32>
    %45 = vector.shape_cast %44 : vector<1x64x8xf32> to vector<64x8xf32>
    %cst_23 = arith.constant dense<0.000000e+00> : vector<16x8xf32>
    %46 = tpu.matmul %13, %45, %cst_23 {dimension_numbers = #tpu.dot_dimension_numbers<[1], [0], [0], [1], [0, 0, 1, 1], [], []>} : vector<16x64xf32>, vector<64x8xf32>, vector<16x8xf32> -> vector<16x8xf32>
    %47 = vector.shape_cast %46 : vector<16x8xf32> to vector<2x8x8xf32>
    %c1_24 = arith.constant 1 : index
    %c0_25 = arith.constant 0 : index
    %c0_26 = arith.constant 0 : index
    %48 = vector.load %arg6[%c1_24, %c0_25, %c0_26] : memref<2x64x8xf32, #tpu.memory_space<vmem>>, vector<1x64x8xf32>
    %49 = vector.shape_cast %48 : vector<1x64x8xf32> to vector<64x8xf32>
    %cst_27 = arith.constant dense<0.000000e+00> : vector<16x8xf32>
    %50 = tpu.matmul %13, %49, %cst_27 {dimension_numbers = #tpu.dot_dimension_numbers<[1], [0], [0], [1], [0, 0, 1, 1], [], []>} : vector<16x64xf32>, vector<64x8xf32>, vector<16x8xf32> -> vector<16x8xf32>
    %51 = vector.shape_cast %50 : vector<16x8xf32> to vector<2x8x8xf32>
    %52 = vector.broadcast %15 : vector<1x8x8xf32> to vector<2x8x8xf32>
    %53 = arith.mulf %47, %52 : vector<2x8x8xf32>
    %54 = vector.broadcast %17 : vector<1x8x8xf32> to vector<2x8x8xf32>
    %55 = arith.mulf %51, %54 : vector<2x8x8xf32>
    %56 = arith.subf %53, %55 : vector<2x8x8xf32>
    %57 = vector.broadcast %15 : vector<1x8x8xf32> to vector<2x8x8xf32>
    %58 = arith.mulf %51, %57 : vector<2x8x8xf32>
    %59 = vector.broadcast %17 : vector<1x8x8xf32> to vector<2x8x8xf32>
    %60 = arith.mulf %47, %59 : vector<2x8x8xf32>
    %61 = arith.addf %58, %60 : vector<2x8x8xf32>
    %c1_28 = arith.constant 1 : index
    %c0_29 = arith.constant 0 : index
    %c0_30 = arith.constant 0 : index
    %62 = vector.load %arg7[%c1_28, %c0_29, %c0_30] : memref<2x64x16xf32, #tpu.memory_space<vmem>>, vector<1x64x16xf32>
    %63 = vector.shape_cast %62 : vector<1x64x16xf32> to vector<64x16xf32>
    %cst_31 = arith.constant dense<0.000000e+00> : vector<16x16xf32>
    %64 = tpu.matmul %13, %63, %cst_31 {dimension_numbers = #tpu.dot_dimension_numbers<[1], [0], [0], [1], [0, 0, 1, 1], [], []>} : vector<16x64xf32>, vector<64x16xf32>, vector<16x16xf32> -> vector<16x16xf32>
    %65 = vector.shape_cast %64 : vector<16x16xf32> to vector<2x8x16xf32>
    %cst_32 = arith.constant 0.000000e+00 : f32
    %66 = vector.broadcast %cst_32 : f32 to vector<16x64xf32>
    %c0_33 = arith.constant 0 : index
    %c0_34 = arith.constant 0 : index
    %c0_35 = arith.constant 0 : index
    %67 = vector.load %arg3[%c0_33, %c0_34, %c0_35] : memref<4x64x8xf32, #tpu.memory_space<vmem>>, vector<1x64x8xf32>
    %68 = vector.shape_cast %67 : vector<1x64x8xf32> to vector<64x8xf32>
    %cst_36 = arith.constant dense<0.000000e+00> : vector<16x8xf32>
    %69 = tpu.matmul %13, %68, %cst_36 {dimension_numbers = #tpu.dot_dimension_numbers<[1], [0], [0], [1], [0, 0, 1, 1], [], []>} : vector<16x64xf32>, vector<64x8xf32>, vector<16x8xf32> -> vector<16x8xf32>
    %70 = vector.shape_cast %69 : vector<16x8xf32> to vector<2x8x8xf32>
    %c0_37 = arith.constant 0 : index
    %c0_38 = arith.constant 0 : index
    %c0_39 = arith.constant 0 : index
    %71 = vector.load %arg4[%c0_37, %c0_38, %c0_39] : memref<4x64x8xf32, #tpu.memory_space<vmem>>, vector<1x64x8xf32>
    %72 = vector.shape_cast %71 : vector<1x64x8xf32> to vector<64x8xf32>
    %cst_40 = arith.constant dense<0.000000e+00> : vector<16x8xf32>
    %73 = tpu.matmul %13, %72, %cst_40 {dimension_numbers = #tpu.dot_dimension_numbers<[1], [0], [0], [1], [0, 0, 1, 1], [], []>} : vector<16x64xf32>, vector<64x8xf32>, vector<16x8xf32> -> vector<16x8xf32>
    %74 = vector.shape_cast %73 : vector<16x8xf32> to vector<2x8x8xf32>
    %75 = vector.broadcast %15 : vector<1x8x8xf32> to vector<2x8x8xf32>
    %76 = arith.mulf %70, %75 : vector<2x8x8xf32>
    %77 = vector.broadcast %17 : vector<1x8x8xf32> to vector<2x8x8xf32>
    %78 = arith.mulf %74, %77 : vector<2x8x8xf32>
    %79 = arith.subf %76, %78 : vector<2x8x8xf32>
    %80 = vector.broadcast %15 : vector<1x8x8xf32> to vector<2x8x8xf32>
    %81 = arith.mulf %74, %80 : vector<2x8x8xf32>
    %82 = vector.broadcast %17 : vector<1x8x8xf32> to vector<2x8x8xf32>
    %83 = arith.mulf %70, %82 : vector<2x8x8xf32>
    %84 = arith.addf %81, %83 : vector<2x8x8xf32>
    "tpu.trace_start"() <{level = 10 : i32, message = "bqd,bkd->bqk"}> : () -> ()
    %cst_41 = arith.constant dense<0.000000e+00> : vector<2x8x8xf32>
    %85 = tpu.matmul %79, %34, %cst_41 {dimension_numbers = #tpu.dot_dimension_numbers<[2], [2], [1], [1], [0, 0, 0, 1, 1, 1], [0], [0]>} : vector<2x8x8xf32>, vector<2x8x8xf32>, vector<2x8x8xf32> -> vector<2x8x8xf32>
    %cst_42 = arith.constant dense<0.000000e+00> : vector<2x8x8xf32>
    %86 = tpu.matmul %84, %39, %cst_42 {dimension_numbers = #tpu.dot_dimension_numbers<[2], [2], [1], [1], [0, 0, 0, 1, 1, 1], [0], [0]>} : vector<2x8x8xf32>, vector<2x8x8xf32>, vector<2x8x8xf32> -> vector<2x8x8xf32>
    "tpu.trace_stop"() : () -> ()
    %87 = arith.addf %85, %86 : vector<2x8x8xf32>
    %cst_43 = arith.constant -3.40282347E+38 : f32
    %88 = vector.shape_cast %21 : vector<1x8x8xi1> to vector<1x8x8xi1>
    %89 = vector.broadcast %88 : vector<1x8x8xi1> to vector<2x8x8xi1>
    %90 = vector.broadcast %cst_43 : f32 to vector<2x8x8xf32>
    %91 = arith.select %89, %87, %90 : vector<2x8x8xi1>, vector<2x8x8xf32>
    %cst_44 = arith.constant dense<0xFF800000> : vector<2x8xf32>
    %92 = vector.multi_reduction <maximumf>, %91, %cst_44 [2] : vector<2x8x8xf32> to vector<2x8xf32>
    %93 = vector.shape_cast %92 : vector<2x8xf32> to vector<2x8x1xf32>
    %94 = vector.broadcast %93 : vector<2x8x1xf32> to vector<2x8x8xf32>
    %95 = arith.subf %91, %94 : vector<2x8x8xf32>
    %96 = math.exp %95 : vector<2x8x8xf32>
    %cst_45 = arith.constant dense<0.000000e+00> : vector<2x8xf32>
    %97 = vector.multi_reduction <add>, %96, %cst_45 [2] : vector<2x8x8xf32> to vector<2x8xf32>
    %98 = vector.shape_cast %97 : vector<2x8xf32> to vector<2x8x1xf32>
    %99 = tpu.reciprocal %98 {approx = true} : vector<2x8x1xf32> -> vector<2x8x1xf32>
    %100 = vector.broadcast %99 : vector<2x8x1xf32> to vector<2x8x8xf32>
    %101 = arith.mulf %96, %100 : vector<2x8x8xf32>
    "tpu.trace_start"() <{level = 10 : i32, message = "bqk,bkd->bqd"}> : () -> ()
    %cst_46 = arith.constant dense<0.000000e+00> : vector<2x8x16xf32>
    %102 = tpu.matmul %101, %43, %cst_46 {dimension_numbers = #tpu.dot_dimension_numbers<[2], [1], [1], [2], [0, 0, 0, 1, 1, 2], [0], [0]>} : vector<2x8x8xf32>, vector<2x8x16xf32>, vector<2x8x16xf32> -> vector<2x8x16xf32>
    "tpu.trace_stop"() : () -> ()
    %103 = vector.shape_cast %102 : vector<2x8x16xf32> to vector<16x16xf32>
    %c0_47 = arith.constant 0 : index
    %c0_48 = arith.constant 0 : index
    %c0_49 = arith.constant 0 : index
    %104 = vector.load %arg8[%c0_47, %c0_48, %c0_49] : memref<4x16x64xf32, #tpu.memory_space<vmem>>, vector<1x16x64xf32>
    %105 = vector.shape_cast %104 : vector<1x16x64xf32> to vector<16x64xf32>
    %cst_50 = arith.constant dense<0.000000e+00> : vector<16x64xf32>
    %106 = tpu.matmul %103, %105, %cst_50 {dimension_numbers = #tpu.dot_dimension_numbers<[1], [0], [0], [1], [0, 0, 1, 1], [], []>} : vector<16x16xf32>, vector<16x64xf32>, vector<16x64xf32> -> vector<16x64xf32>
    %107 = arith.addf %66, %106 : vector<16x64xf32>
    %c1_51 = arith.constant 1 : index
    %c0_52 = arith.constant 0 : index
    %c0_53 = arith.constant 0 : index
    %108 = vector.load %arg3[%c1_51, %c0_52, %c0_53] : memref<4x64x8xf32, #tpu.memory_space<vmem>>, vector<1x64x8xf32>
    %109 = vector.shape_cast %108 : vector<1x64x8xf32> to vector<64x8xf32>
    %cst_54 = arith.constant dense<0.000000e+00> : vector<16x8xf32>
    %110 = tpu.matmul %13, %109, %cst_54 {dimension_numbers = #tpu.dot_dimension_numbers<[1], [0], [0], [1], [0, 0, 1, 1], [], []>} : vector<16x64xf32>, vector<64x8xf32>, vector<16x8xf32> -> vector<16x8xf32>
    %111 = vector.shape_cast %110 : vector<16x8xf32> to vector<2x8x8xf32>
    %c1_55 = arith.constant 1 : index
    %c0_56 = arith.constant 0 : index
    %c0_57 = arith.constant 0 : index
    %112 = vector.load %arg4[%c1_55, %c0_56, %c0_57] : memref<4x64x8xf32, #tpu.memory_space<vmem>>, vector<1x64x8xf32>
    %113 = vector.shape_cast %112 : vector<1x64x8xf32> to vector<64x8xf32>
    %cst_58 = arith.constant dense<0.000000e+00> : vector<16x8xf32>
    %114 = tpu.matmul %13, %113, %cst_58 {dimension_numbers = #tpu.dot_dimension_numbers<[1], [0], [0], [1], [0, 0, 1, 1], [], []>} : vector<16x64xf32>, vector<64x8xf32>, vector<16x8xf32> -> vector<16x8xf32>
    %115 = vector.shape_cast %114 : vector<16x8xf32> to vector<2x8x8xf32>
    %116 = vector.broadcast %15 : vector<1x8x8xf32> to vector<2x8x8xf32>
    %117 = arith.mulf %111, %116 : vector<2x8x8xf32>
    %118 = vector.broadcast %17 : vector<1x8x8xf32> to vector<2x8x8xf32>
    %119 = arith.mulf %115, %118 : vector<2x8x8xf32>
    %120 = arith.subf %117, %119 : vector<2x8x8xf32>
    %121 = vector.broadcast %15 : vector<1x8x8xf32> to vector<2x8x8xf32>
    %122 = arith.mulf %115, %121 : vector<2x8x8xf32>
    %123 = vector.broadcast %17 : vector<1x8x8xf32> to vector<2x8x8xf32>
    %124 = arith.mulf %111, %123 : vector<2x8x8xf32>
    %125 = arith.addf %122, %124 : vector<2x8x8xf32>
    "tpu.trace_start"() <{level = 10 : i32, message = "bqd,bkd->bqk"}> : () -> ()
    %cst_59 = arith.constant dense<0.000000e+00> : vector<2x8x8xf32>
    %126 = tpu.matmul %120, %34, %cst_59 {dimension_numbers = #tpu.dot_dimension_numbers<[2], [2], [1], [1], [0, 0, 0, 1, 1, 1], [0], [0]>} : vector<2x8x8xf32>, vector<2x8x8xf32>, vector<2x8x8xf32> -> vector<2x8x8xf32>
    %cst_60 = arith.constant dense<0.000000e+00> : vector<2x8x8xf32>
    %127 = tpu.matmul %125, %39, %cst_60 {dimension_numbers = #tpu.dot_dimension_numbers<[2], [2], [1], [1], [0, 0, 0, 1, 1, 1], [0], [0]>} : vector<2x8x8xf32>, vector<2x8x8xf32>, vector<2x8x8xf32> -> vector<2x8x8xf32>
    "tpu.trace_stop"() : () -> ()
    %128 = arith.addf %126, %127 : vector<2x8x8xf32>
    %cst_61 = arith.constant -3.40282347E+38 : f32
    %129 = vector.shape_cast %21 : vector<1x8x8xi1> to vector<1x8x8xi1>
    %130 = vector.broadcast %129 : vector<1x8x8xi1> to vector<2x8x8xi1>
    %131 = vector.broadcast %cst_61 : f32 to vector<2x8x8xf32>
    %132 = arith.select %130, %128, %131 : vector<2x8x8xi1>, vector<2x8x8xf32>
    %cst_62 = arith.constant dense<0xFF800000> : vector<2x8xf32>
    %133 = vector.multi_reduction <maximumf>, %132, %cst_62 [2] : vector<2x8x8xf32> to vector<2x8xf32>
    %134 = vector.shape_cast %133 : vector<2x8xf32> to vector<2x8x1xf32>
    %135 = vector.broadcast %134 : vector<2x8x1xf32> to vector<2x8x8xf32>
    %136 = arith.subf %132, %135 : vector<2x8x8xf32>
    %137 = math.exp %136 : vector<2x8x8xf32>
    %cst_63 = arith.constant dense<0.000000e+00> : vector<2x8xf32>
    %138 = vector.multi_reduction <add>, %137, %cst_63 [2] : vector<2x8x8xf32> to vector<2x8xf32>
    %139 = vector.shape_cast %138 : vector<2x8xf32> to vector<2x8x1xf32>
    %140 = tpu.reciprocal %139 {approx = true} : vector<2x8x1xf32> -> vector<2x8x1xf32>
    %141 = vector.broadcast %140 : vector<2x8x1xf32> to vector<2x8x8xf32>
    %142 = arith.mulf %137, %141 : vector<2x8x8xf32>
    "tpu.trace_start"() <{level = 10 : i32, message = "bqk,bkd->bqd"}> : () -> ()
    %cst_64 = arith.constant dense<0.000000e+00> : vector<2x8x16xf32>
    %143 = tpu.matmul %142, %43, %cst_64 {dimension_numbers = #tpu.dot_dimension_numbers<[2], [1], [1], [2], [0, 0, 0, 1, 1, 2], [0], [0]>} : vector<2x8x8xf32>, vector<2x8x16xf32>, vector<2x8x16xf32> -> vector<2x8x16xf32>
    "tpu.trace_stop"() : () -> ()
    %144 = vector.shape_cast %143 : vector<2x8x16xf32> to vector<16x16xf32>
    %c1_65 = arith.constant 1 : index
    %c0_66 = arith.constant 0 : index
    %c0_67 = arith.constant 0 : index
    %145 = vector.load %arg8[%c1_65, %c0_66, %c0_67] : memref<4x16x64xf32, #tpu.memory_space<vmem>>, vector<1x16x64xf32>
    %146 = vector.shape_cast %145 : vector<1x16x64xf32> to vector<16x64xf32>
    %cst_68 = arith.constant dense<0.000000e+00> : vector<16x64xf32>
    %147 = tpu.matmul %144, %146, %cst_68 {dimension_numbers = #tpu.dot_dimension_numbers<[1], [0], [0], [1], [0, 0, 1, 1], [], []>} : vector<16x16xf32>, vector<16x64xf32>, vector<16x64xf32> -> vector<16x64xf32>
    %148 = arith.addf %107, %147 : vector<16x64xf32>
    %c2 = arith.constant 2 : index
    %c0_69 = arith.constant 0 : index
    %c0_70 = arith.constant 0 : index
    %149 = vector.load %arg3[%c2, %c0_69, %c0_70] : memref<4x64x8xf32, #tpu.memory_space<vmem>>, vector<1x64x8xf32>
    %150 = vector.shape_cast %149 : vector<1x64x8xf32> to vector<64x8xf32>
    %cst_71 = arith.constant dense<0.000000e+00> : vector<16x8xf32>
    %151 = tpu.matmul %13, %150, %cst_71 {dimension_numbers = #tpu.dot_dimension_numbers<[1], [0], [0], [1], [0, 0, 1, 1], [], []>} : vector<16x64xf32>, vector<64x8xf32>, vector<16x8xf32> -> vector<16x8xf32>
    %152 = vector.shape_cast %151 : vector<16x8xf32> to vector<2x8x8xf32>
    %c2_72 = arith.constant 2 : index
    %c0_73 = arith.constant 0 : index
    %c0_74 = arith.constant 0 : index
    %153 = vector.load %arg4[%c2_72, %c0_73, %c0_74] : memref<4x64x8xf32, #tpu.memory_space<vmem>>, vector<1x64x8xf32>
    %154 = vector.shape_cast %153 : vector<1x64x8xf32> to vector<64x8xf32>
    %cst_75 = arith.constant dense<0.000000e+00> : vector<16x8xf32>
    %155 = tpu.matmul %13, %154, %cst_75 {dimension_numbers = #tpu.dot_dimension_numbers<[1], [0], [0], [1], [0, 0, 1, 1], [], []>} : vector<16x64xf32>, vector<64x8xf32>, vector<16x8xf32> -> vector<16x8xf32>
    %156 = vector.shape_cast %155 : vector<16x8xf32> to vector<2x8x8xf32>
    %157 = vector.broadcast %15 : vector<1x8x8xf32> to vector<2x8x8xf32>
    %158 = arith.mulf %152, %157 : vector<2x8x8xf32>
    %159 = vector.broadcast %17 : vector<1x8x8xf32> to vector<2x8x8xf32>
    %160 = arith.mulf %156, %159 : vector<2x8x8xf32>
    %161 = arith.subf %158, %160 : vector<2x8x8xf32>
    %162 = vector.broadcast %15 : vector<1x8x8xf32> to vector<2x8x8xf32>
    %163 = arith.mulf %156, %162 : vector<2x8x8xf32>
    %164 = vector.broadcast %17 : vector<1x8x8xf32> to vector<2x8x8xf32>
    %165 = arith.mulf %152, %164 : vector<2x8x8xf32>
    %166 = arith.addf %163, %165 : vector<2x8x8xf32>
    "tpu.trace_start"() <{level = 10 : i32, message = "bqd,bkd->bqk"}> : () -> ()
    %cst_76 = arith.constant dense<0.000000e+00> : vector<2x8x8xf32>
    %167 = tpu.matmul %161, %56, %cst_76 {dimension_numbers = #tpu.dot_dimension_numbers<[2], [2], [1], [1], [0, 0, 0, 1, 1, 1], [0], [0]>} : vector<2x8x8xf32>, vector<2x8x8xf32>, vector<2x8x8xf32> -> vector<2x8x8xf32>
    %cst_77 = arith.constant dense<0.000000e+00> : vector<2x8x8xf32>
    %168 = tpu.matmul %166, %61, %cst_77 {dimension_numbers = #tpu.dot_dimension_numbers<[2], [2], [1], [1], [0, 0, 0, 1, 1, 1], [0], [0]>} : vector<2x8x8xf32>, vector<2x8x8xf32>, vector<2x8x8xf32> -> vector<2x8x8xf32>
    "tpu.trace_stop"() : () -> ()
    %169 = arith.addf %167, %168 : vector<2x8x8xf32>
    %cst_78 = arith.constant -3.40282347E+38 : f32
    %170 = vector.shape_cast %21 : vector<1x8x8xi1> to vector<1x8x8xi1>
    %171 = vector.broadcast %170 : vector<1x8x8xi1> to vector<2x8x8xi1>
    %172 = vector.broadcast %cst_78 : f32 to vector<2x8x8xf32>
    %173 = arith.select %171, %169, %172 : vector<2x8x8xi1>, vector<2x8x8xf32>
    %cst_79 = arith.constant dense<0xFF800000> : vector<2x8xf32>
    %174 = vector.multi_reduction <maximumf>, %173, %cst_79 [2] : vector<2x8x8xf32> to vector<2x8xf32>
    %175 = vector.shape_cast %174 : vector<2x8xf32> to vector<2x8x1xf32>
    %176 = vector.broadcast %175 : vector<2x8x1xf32> to vector<2x8x8xf32>
    %177 = arith.subf %173, %176 : vector<2x8x8xf32>
    %178 = math.exp %177 : vector<2x8x8xf32>
    %cst_80 = arith.constant dense<0.000000e+00> : vector<2x8xf32>
    %179 = vector.multi_reduction <add>, %178, %cst_80 [2] : vector<2x8x8xf32> to vector<2x8xf32>
    %180 = vector.shape_cast %179 : vector<2x8xf32> to vector<2x8x1xf32>
    %181 = tpu.reciprocal %180 {approx = true} : vector<2x8x1xf32> -> vector<2x8x1xf32>
    %182 = vector.broadcast %181 : vector<2x8x1xf32> to vector<2x8x8xf32>
    %183 = arith.mulf %178, %182 : vector<2x8x8xf32>
    "tpu.trace_start"() <{level = 10 : i32, message = "bqk,bkd->bqd"}> : () -> ()
    %cst_81 = arith.constant dense<0.000000e+00> : vector<2x8x16xf32>
    %184 = tpu.matmul %183, %65, %cst_81 {dimension_numbers = #tpu.dot_dimension_numbers<[2], [1], [1], [2], [0, 0, 0, 1, 1, 2], [0], [0]>} : vector<2x8x8xf32>, vector<2x8x16xf32>, vector<2x8x16xf32> -> vector<2x8x16xf32>
    "tpu.trace_stop"() : () -> ()
    %185 = vector.shape_cast %184 : vector<2x8x16xf32> to vector<16x16xf32>
    %c2_82 = arith.constant 2 : index
    %c0_83 = arith.constant 0 : index
    %c0_84 = arith.constant 0 : index
    %186 = vector.load %arg8[%c2_82, %c0_83, %c0_84] : memref<4x16x64xf32, #tpu.memory_space<vmem>>, vector<1x16x64xf32>
    %187 = vector.shape_cast %186 : vector<1x16x64xf32> to vector<16x64xf32>
    %cst_85 = arith.constant dense<0.000000e+00> : vector<16x64xf32>
    %188 = tpu.matmul %185, %187, %cst_85 {dimension_numbers = #tpu.dot_dimension_numbers<[1], [0], [0], [1], [0, 0, 1, 1], [], []>} : vector<16x16xf32>, vector<16x64xf32>, vector<16x64xf32> -> vector<16x64xf32>
    %189 = arith.addf %148, %188 : vector<16x64xf32>
    %c3 = arith.constant 3 : index
    %c0_86 = arith.constant 0 : index
    %c0_87 = arith.constant 0 : index
    %190 = vector.load %arg3[%c3, %c0_86, %c0_87] : memref<4x64x8xf32, #tpu.memory_space<vmem>>, vector<1x64x8xf32>
    %191 = vector.shape_cast %190 : vector<1x64x8xf32> to vector<64x8xf32>
    %cst_88 = arith.constant dense<0.000000e+00> : vector<16x8xf32>
    %192 = tpu.matmul %13, %191, %cst_88 {dimension_numbers = #tpu.dot_dimension_numbers<[1], [0], [0], [1], [0, 0, 1, 1], [], []>} : vector<16x64xf32>, vector<64x8xf32>, vector<16x8xf32> -> vector<16x8xf32>
    %193 = vector.shape_cast %192 : vector<16x8xf32> to vector<2x8x8xf32>
    %c3_89 = arith.constant 3 : index
    %c0_90 = arith.constant 0 : index
    %c0_91 = arith.constant 0 : index
    %194 = vector.load %arg4[%c3_89, %c0_90, %c0_91] : memref<4x64x8xf32, #tpu.memory_space<vmem>>, vector<1x64x8xf32>
    %195 = vector.shape_cast %194 : vector<1x64x8xf32> to vector<64x8xf32>
    %cst_92 = arith.constant dense<0.000000e+00> : vector<16x8xf32>
    %196 = tpu.matmul %13, %195, %cst_92 {dimension_numbers = #tpu.dot_dimension_numbers<[1], [0], [0], [1], [0, 0, 1, 1], [], []>} : vector<16x64xf32>, vector<64x8xf32>, vector<16x8xf32> -> vector<16x8xf32>
    %197 = vector.shape_cast %196 : vector<16x8xf32> to vector<2x8x8xf32>
    %198 = vector.broadcast %15 : vector<1x8x8xf32> to vector<2x8x8xf32>
    %199 = arith.mulf %193, %198 : vector<2x8x8xf32>
    %200 = vector.broadcast %17 : vector<1x8x8xf32> to vector<2x8x8xf32>
    %201 = arith.mulf %197, %200 : vector<2x8x8xf32>
    %202 = arith.subf %199, %201 : vector<2x8x8xf32>
    %203 = vector.broadcast %15 : vector<1x8x8xf32> to vector<2x8x8xf32>
    %204 = arith.mulf %197, %203 : vector<2x8x8xf32>
    %205 = vector.broadcast %17 : vector<1x8x8xf32> to vector<2x8x8xf32>
    %206 = arith.mulf %193, %205 : vector<2x8x8xf32>
    %207 = arith.addf %204, %206 : vector<2x8x8xf32>
    "tpu.trace_start"() <{level = 10 : i32, message = "bqd,bkd->bqk"}> : () -> ()
    %cst_93 = arith.constant dense<0.000000e+00> : vector<2x8x8xf32>
    %208 = tpu.matmul %202, %56, %cst_93 {dimension_numbers = #tpu.dot_dimension_numbers<[2], [2], [1], [1], [0, 0, 0, 1, 1, 1], [0], [0]>} : vector<2x8x8xf32>, vector<2x8x8xf32>, vector<2x8x8xf32> -> vector<2x8x8xf32>
    %cst_94 = arith.constant dense<0.000000e+00> : vector<2x8x8xf32>
    %209 = tpu.matmul %207, %61, %cst_94 {dimension_numbers = #tpu.dot_dimension_numbers<[2], [2], [1], [1], [0, 0, 0, 1, 1, 1], [0], [0]>} : vector<2x8x8xf32>, vector<2x8x8xf32>, vector<2x8x8xf32> -> vector<2x8x8xf32>
    "tpu.trace_stop"() : () -> ()
    %210 = arith.addf %208, %209 : vector<2x8x8xf32>
    %cst_95 = arith.constant -3.40282347E+38 : f32
    %211 = vector.shape_cast %21 : vector<1x8x8xi1> to vector<1x8x8xi1>
    %212 = vector.broadcast %211 : vector<1x8x8xi1> to vector<2x8x8xi1>
    %213 = vector.broadcast %cst_95 : f32 to vector<2x8x8xf32>
    %214 = arith.select %212, %210, %213 : vector<2x8x8xi1>, vector<2x8x8xf32>
    %cst_96 = arith.constant dense<0xFF800000> : vector<2x8xf32>
    %215 = vector.multi_reduction <maximumf>, %214, %cst_96 [2] : vector<2x8x8xf32> to vector<2x8xf32>
    %216 = vector.shape_cast %215 : vector<2x8xf32> to vector<2x8x1xf32>
    %217 = vector.broadcast %216 : vector<2x8x1xf32> to vector<2x8x8xf32>
    %218 = arith.subf %214, %217 : vector<2x8x8xf32>
    %219 = math.exp %218 : vector<2x8x8xf32>
    %cst_97 = arith.constant dense<0.000000e+00> : vector<2x8xf32>
    %220 = vector.multi_reduction <add>, %219, %cst_97 [2] : vector<2x8x8xf32> to vector<2x8xf32>
    %221 = vector.shape_cast %220 : vector<2x8xf32> to vector<2x8x1xf32>
    %222 = tpu.reciprocal %221 {approx = true} : vector<2x8x1xf32> -> vector<2x8x1xf32>
    %223 = vector.broadcast %222 : vector<2x8x1xf32> to vector<2x8x8xf32>
    %224 = arith.mulf %219, %223 : vector<2x8x8xf32>
    "tpu.trace_start"() <{level = 10 : i32, message = "bqk,bkd->bqd"}> : () -> ()
    %cst_98 = arith.constant dense<0.000000e+00> : vector<2x8x16xf32>
    %225 = tpu.matmul %224, %65, %cst_98 {dimension_numbers = #tpu.dot_dimension_numbers<[2], [1], [1], [2], [0, 0, 0, 1, 1, 2], [0], [0]>} : vector<2x8x8xf32>, vector<2x8x16xf32>, vector<2x8x16xf32> -> vector<2x8x16xf32>
    "tpu.trace_stop"() : () -> ()
    %226 = vector.shape_cast %225 : vector<2x8x16xf32> to vector<16x16xf32>
    %c3_99 = arith.constant 3 : index
    %c0_100 = arith.constant 0 : index
    %c0_101 = arith.constant 0 : index
    %227 = vector.load %arg8[%c3_99, %c0_100, %c0_101] : memref<4x16x64xf32, #tpu.memory_space<vmem>>, vector<1x16x64xf32>
    %228 = vector.shape_cast %227 : vector<1x16x64xf32> to vector<16x64xf32>
    %cst_102 = arith.constant dense<0.000000e+00> : vector<16x64xf32>
    %229 = tpu.matmul %226, %228, %cst_102 {dimension_numbers = #tpu.dot_dimension_numbers<[1], [0], [0], [1], [0, 0, 1, 1], [], []>} : vector<16x16xf32>, vector<16x64xf32>, vector<16x64xf32> -> vector<16x64xf32>
    %230 = arith.addf %189, %229 : vector<16x64xf32>
    %231 = arith.addf %0, %230 : vector<16x64xf32>
    %232 = arith.mulf %231, %231 : vector<16x64xf32>
    %cst_103 = arith.constant dense<0.000000e+00> : vector<16xf32>
    %233 = vector.multi_reduction <add>, %232, %cst_103 [1] : vector<16x64xf32> to vector<16xf32>
    %234 = vector.shape_cast %233 : vector<16xf32> to vector<16x1xf32>
    %cst_104 = arith.constant 6.400000e+01 : f32
    %235 = vector.broadcast %cst_104 : f32 to vector<16x1xf32>
    %236 = arith.divf %234, %235 : vector<16x1xf32>
    %cst_105 = arith.constant 9.99999974E-6 : f32
    %237 = vector.broadcast %cst_105 : f32 to vector<16x1xf32>
    %238 = arith.addf %236, %237 : vector<16x1xf32>
    %239 = math.rsqrt %238 : vector<16x1xf32>
    %240 = vector.broadcast %239 : vector<16x1xf32> to vector<16x64xf32>
    %241 = arith.mulf %231, %240 : vector<16x64xf32>
    %c0_106 = arith.constant 0 : index
    %c0_107 = arith.constant 0 : index
    %242 = vector.load %arg2[%c0_106, %c0_107] : memref<1x64xf32, #tpu.memory_space<vmem>>, vector<1x64xf32>
    %243 = vector.broadcast %242 : vector<1x64xf32> to vector<16x64xf32>
    %244 = arith.mulf %241, %243 : vector<16x64xf32>
    %c0_108 = arith.constant 0 : index
    %c0_109 = arith.constant 0 : index
    %245 = vector.load %arg11[%c0_108, %c0_109] : memref<64x512xf32, #tpu.memory_space<vmem>>, vector<64x512xf32>
    %cst_110 = arith.constant dense<0.000000e+00> : vector<16x512xf32>
    %246 = tpu.matmul %244, %245, %cst_110 {dimension_numbers = #tpu.dot_dimension_numbers<[1], [0], [0], [1], [0, 0, 1, 1], [], []>} : vector<16x64xf32>, vector<64x512xf32>, vector<16x512xf32> -> vector<16x512xf32>
    %247 = vector.extract_strided_slice %246 {offsets = [0, 0], sizes = [16, 256], strides = [1, 1]} : vector<16x512xf32> to vector<16x256xf32>
    %248 = vector.extract_strided_slice %246 {offsets = [0, 256], sizes = [16, 256], strides = [1, 1]} : vector<16x512xf32> to vector<16x256xf32>
    %249 = arith.negf %247 : vector<16x256xf32>
    %250 = math.exp %249 : vector<16x256xf32>
    %cst_111 = arith.constant 1.000000e+00 : f32
    %251 = vector.broadcast %cst_111 : f32 to vector<16x256xf32>
    %252 = arith.addf %251, %250 : vector<16x256xf32>
    %253 = arith.divf %251, %252 : vector<16x256xf32>
    %254 = arith.mulf %247, %253 : vector<16x256xf32>
    %255 = arith.mulf %254, %248 : vector<16x256xf32>
    %c0_112 = arith.constant 0 : index
    %c0_113 = arith.constant 0 : index
    %256 = vector.load %arg12[%c0_112, %c0_113] : memref<256x64xf32, #tpu.memory_space<vmem>>, vector<256x64xf32>
    %cst_114 = arith.constant dense<0.000000e+00> : vector<16x64xf32>
    %257 = tpu.matmul %255, %256, %cst_114 {dimension_numbers = #tpu.dot_dimension_numbers<[1], [0], [0], [1], [0, 0, 1, 1], [], []>} : vector<16x256xf32>, vector<256x64xf32>, vector<16x64xf32> -> vector<16x64xf32>
    %258 = arith.addf %231, %257 : vector<16x64xf32>
    %c0_115 = arith.constant 0 : index
    %c0_116 = arith.constant 0 : index
    %259 = vector.load %arg13[%c0_115, %c0_116] : memref<16x64xf32, #tpu.memory_space<vmem>>, vector<16x64xf32>
    tpu.vector_store %arg13[%c0_115, %c0_116], %258 {strides = array<i32>} : memref<16x64xf32, #tpu.memory_space<vmem>>, vector<16x64xf32>,
    return
  }
}

</mosaic_0001>

<llo_original>
// kernel: transformer_block.1
$region0: #{transformer_block.1}
  #allocation0 [shape = 'u32[]', space=smem, size = 0x4, offset = 0x4, fixed_abs, tag = 'smem constant byte address 0x4 - core index']
  #allocation1 [shape = 'u32[72,128]{1,0:T(1,128)}', space=vmem, size = 0x9000, scoped, tag = 'internal scratch']
  %s0 = inlined_call_operand.vmem [shape: f32[16,64], index: 0, kind: input, shape index: {}]
  %s1 = inlined_call_operand.vmem [shape: f32[1,64], index: 1, kind: input, shape index: {}]
  %s2 = inlined_call_operand.vmem [shape: f32[1,64], index: 2, kind: input, shape index: {}]
  %s3 = inlined_call_operand.vmem [shape: f32[4,64,8], index: 3, kind: input, shape index: {}]
  %s4 = inlined_call_operand.vmem [shape: f32[4,64,8], index: 4, kind: input, shape index: {}]
  %s5 = inlined_call_operand.vmem [shape: f32[2,64,8], index: 5, kind: input, shape index: {}]
  %s6 = inlined_call_operand.vmem [shape: f32[2,64,8], index: 6, kind: input, shape index: {}]
  %s7 = inlined_call_operand.vmem [shape: f32[2,64,16], index: 7, kind: input, shape index: {}]
  %s8 = inlined_call_operand.vmem [shape: f32[4,16,64], index: 8, kind: input, shape index: {}]
  %s9 = inlined_call_operand.vmem [shape: f32[8,8], index: 9, kind: input, shape index: {}]
  %s10 = inlined_call_operand.vmem [shape: f32[8,8], index: 10, kind: input, shape index: {}]
  %s11 = inlined_call_operand.vmem [shape: f32[64,512], index: 11, kind: input, shape index: {}]
  %s12 = inlined_call_operand.vmem [shape: f32[256,64], index: 12, kind: input, shape index: {}]
  %s13 = inlined_call_operand.hbm [shape: f32[16,64], index: 13, kind: output, shape index: {}]
  %s14 = sld [smem:[#allocation0]]
  $region62: #{transformer_block.1} parent=0
    _
  %s16 = ssub.s32 1, %s14
  %s17 = scalar_select 0, %s16, %s14
  $region1: #{transformer_block.1} parent=0
    #allocation2 [shape = 'u8[8192]{0}', space=vmem, size = 0x2000, scoped, tag = 'output window, operand 0, single buffered']
    #allocation3 [shape = 's32[1]{0}', space=sflag, size = 0x4, scoped, tag = 'scoped memory for transformer_block.1']
    %18 = vsyncpa [#allocation3], 0
    // Predicated region
    $region2: #{transformer_block.1} parent=1 // pred_check
      _
    $region3: #{transformer_block.1} parent=1 // pred_check_branch
      %20 = sbr.rel (0) target = $region5
    $region4: #{transformer_block.1} parent=1 // pred_region
      _
    $region5: #{transformer_block.1} parent=1 // pred_fallthru
      _
    // Predicated region
    $region6: #{transformer_block.1} parent=1 // pred_check
      _
    $region7: #{transformer_block.1} parent=1 // pred_check_branch
      %22 = sbr.rel (0) target = $region9
    $region8: #{transformer_block.1} parent=1 // pred_region
      _
    $region9: #{transformer_block.1} parent=1 // pred_fallthru
      _
    // Predicated region
    $region10: #{transformer_block.1} parent=1 // pred_check
      _
    $region11: #{transformer_block.1} parent=1 // pred_check_branch
      %24 = sbr.rel (0) target = $region13
    $region12: #{transformer_block.1} parent=1 // pred_region
      _
    $region13: #{transformer_block.1} parent=1 // pred_fallthru
      _
    // Predicated region
    $region14: #{transformer_block.1} parent=1 // pred_check
      _
    $region15: #{transformer_block.1} parent=1 // pred_check_branch
      %26 = sbr.rel (0) target = $region17
    $region16: #{transformer_block.1} parent=1 // pred_region
      _
    $region17: #{transformer_block.1} parent=1 // pred_fallthru
      _
    // Predicated region
    $region18: #{transformer_block.1} parent=1 // pred_check
      _
    $region19: #{transformer_block.1} parent=1 // pred_check_branch
      %28 = sbr.rel (0) target = $region21
    $region20: #{transformer_block.1} parent=1 // pred_region
      _
    $region21: #{transformer_block.1} parent=1 // pred_fallthru
      _
    // Predicated region
    $region22: #{transformer_block.1} parent=1 // pred_check
      _
    $region23: #{transformer_block.1} parent=1 // pred_check_branch
      %30 = sbr.rel (0) target = $region25
    $region24: #{transformer_block.1} parent=1 // pred_region
      _
    $region25: #{transformer_block.1} parent=1 // pred_fallthru
      _
    // Predicated region
    $region26: #{transformer_block.1} parent=1 // pred_check
      _
    $region27: #{transformer_block.1} parent=1 // pred_check_branch
      %32 = sbr.rel (0) target = $region29
    $region28: #{transformer_block.1} parent=1 // pred_region
      _
    $region29: #{transformer_block.1} parent=1 // pred_fallthru
      _
    // Predicated region
    $region30: #{transformer_block.1} parent=1 // pred_check
      _
    $region31: #{transformer_block.1} parent=1 // pred_check_branch
      %34 = sbr.rel (0) target = $region33
    $region32: #{transformer_block.1} parent=1 // pred_region
      _
    $region33: #{transformer_block.1} parent=1 // pred_fallthru
      _
    // Predicated region
    $region34: #{transformer_block.1} parent=1 // pred_check
      _
    $region35: #{transformer_block.1} parent=1 // pred_check_branch
      %36 = sbr.rel (0) target = $region37
    $region36: #{transformer_block.1} parent=1 // pred_region
      _
    $region37: #{transformer_block.1} parent=1 // pred_fallthru
      _
    // Predicated region
    $region38: #{transformer_block.1} parent=1 // pred_check
      _
    $region39: #{transformer_block.1} parent=1 // pred_check_branch
      %38 = sbr.rel (0) target = $region41
    $region40: #{transformer_block.1} parent=1 // pred_region
      _
    $region41: #{transformer_block.1} parent=1 // pred_fallthru
      _
    // Predicated region
    $region42: #{transformer_block.1} parent=1 // pred_check
      _
    $region43: #{transformer_block.1} parent=1 // pred_check_branch
      %40 = sbr.rel (0) target = $region45
    $region44: #{transformer_block.1} parent=1 // pred_region
      _
    $region45: #{transformer_block.1} parent=1 // pred_fallthru
      _
    // Predicated region
    $region46: #{transformer_block.1} parent=1 // pred_check
      _
    $region47: #{transformer_block.1} parent=1 // pred_check_branch
      %42 = sbr.rel (0) target = $region49
    $region48: #{transformer_block.1} parent=1 // pred_region
      _
    $region49: #{transformer_block.1} parent=1 // pred_fallthru
      _
    // Predicated region
    $region50: #{transformer_block.1} parent=1 // pred_check
      _
    $region51: #{transformer_block.1} parent=1 // pred_check_branch
      %44 = sbr.rel (0) target = $region53
    $region52: #{transformer_block.1} parent=1 // pred_region
      _
    $region53: #{transformer_block.1} parent=1 // pred_fallthru
      _
    %v45 = vld [vmem:[%s0] sm:$0xff]
    %v46 = vld [vmem:[%s0 + $0x8] sm:$0xff]
    %v47 = vmul.f32 %v45, %v45
    %v48 = vmul.f32 %v46, %v46
    %vm49 = vcmask 523264
    %v50 = vsel %vm49, %v47, 0.0
    %51 = vadd.xlane.f32.xlu0 %v50
    %v52 = vpop.xlane.xlu0 %51
    %v53 = vsel %vm49, %v48, 0.0
    %54 = vadd.xlane.f32.xlu0 %v53
    %v55 = vpop.xlane.xlu0 %54
    %v56 = vrcp.pop 64.0
    %v57 = vmul.f32 64.0, %v56
    %v58 = vsub.f32 1.0, %v57
    %v59 = vmul.f32 %v56, %v58
    %v60 = vadd.f32 %v56, %v59
    %vm61 = vweird.f32 %v56
    %v62 = vsel %vm61, %v56, %v60
    %v63 = vmul.f32 %v52, %v62
    %v64 = vmul.f32 %v55, %v62
    %v65 = vadd.f32 %v63, 1e-05
    %v66 = vadd.f32 %v64, 1e-05
    %v67 = vrsqrt.pop %v65
    %v68 = vmul.f32 %v67, %v65
    %v69 = vmul.f32 %v68, %v67
    %v70 = vmul.f32 0.5, %v69
    %v71 = vsub.f32 1.5, %v70
    %v72 = vmul.f32 %v67, %v71
    %vm73 = vweird.f32 %v65
    %vm74 = vweird.f32 %v67
    %vm75 = vmor %vm73, %vm74
    %v76 = vsel %vm75, %v67, %v72
    %v77 = vrsqrt.pop %v66
    %v78 = vmul.f32 %v77, %v66
    %v79 = vmul.f32 %v78, %v77
    %v80 = vmul.f32 0.5, %v79
    %v81 = vsub.f32 1.5, %v80
    %v82 = vmul.f32 %v77, %v81
    %vm83 = vweird.f32 %v66
    %vm84 = vweird.f32 %v77
    %vm85 = vmor %vm83, %vm84
    %v86 = vsel %vm85, %v77, %v82
    %v87 = vmul.f32 %v45, %v76
    %v88 = vmul.f32 %v46, %v86
    %v89 = vld [vmem:[%s1] sm:$0x1]
    %v91 = vperm.slane %v89, 0
    %v93 = vmul.f32 %v87, %v91
    %v94 = vmul.f32 %v88, %v91
    %v95 = vld [vmem:[%s9] sm:$0xff]
    %v96 = vld [vmem:[%s10] sm:$0xff]
    %v97 = vlaneseq
    %v98 = vshrl.u32 %v97, 7
    %v99 = vlaneseq
    %v100 = vand.u32 %v99, 127
    %vm101 = vcmp.le.s32.totalorder %v100, %v98
    %v102 = vld [vmem:[%s5] sm:$0xff]
    %v103 = vld [vmem:[%s5 + $0x8] sm:$0xff]
    %v104 = vld [vmem:[%s5 + $0x10] sm:$0xff]
    %v105 = vld [vmem:[%s5 + $0x18] sm:$0xff]
    %v106 = vld [vmem:[%s5 + $0x20] sm:$0xff]
    %v107 = vld [vmem:[%s5 + $0x28] sm:$0xff]
    %v108 = vld [vmem:[%s5 + $0x30] sm:$0xff]
    %v109 = vld [vmem:[%s5 + $0x38] sm:$0xff]
    %v111 = vsel %vm49, %v93, 0
    %v114 = vsel %vm49, %v94, 0
    %116 = vmatpush.msra.mxu0 0.0
    %117 = vmatpush.msra.mxu0 0.0
    %118 = vmatpush.msra.mxu0 0.0
    %119 = vmatpush.msra.mxu0 0.0
    %120 = vmatpush.msra.mxu0 0.0
    %121 = vmatpush.msra.mxu0 0.0
    %122 = vmatpush.msra.mxu0 0.0
    %123 = vmatpush.msra.mxu0 0.0
    %124 = vmatpush.msra.mxu0 %v109
    %125 = vmatpush.msra.mxu0 %v108
    %126 = vmatpush.msra.mxu0 %v107
    %127 = vmatpush.msra.mxu0 %v106
    %128 = vmatpush.msra.mxu0 %v105
    %129 = vmatpush.msra.mxu0 %v104
    %130 = vmatpush.msra.mxu0 %v103
    %131 = vmatpush.msra.mxu0 %v102
    %132 = vmatmul.f32.gmra.mxu0 %v111
    %v133 = vpop.f32.mrf.mxu0
    %v134 = vadd.f32 0.0, %v133
    %135 = vmatmul.f32.gmra.mxu0 %v114
    %v136 = vpop.f32.mrf.mxu0
    %v137 = vadd.f32 0.0, %v136
    %138 = vdwg.mxu0
    %v139 = vld [vmem:[%s6] sm:$0xff]
    %v140 = vld [vmem:[%s6 + $0x8] sm:$0xff]
    %v141 = vld [vmem:[%s6 + $0x10] sm:$0xff]
    %v142 = vld [vmem:[%s6 + $0x18] sm:$0xff]
    %v143 = vld [vmem:[%s6 + $0x20] sm:$0xff]
    %v144 = vld [vmem:[%s6 + $0x28] sm:$0xff]
    %v145 = vld [vmem:[%s6 + $0x30] sm:$0xff]
    %v146 = vld [vmem:[%s6 + $0x38] sm:$0xff]
    %147 = vmatpush.msra.mxu0 0.0
    %148 = vmatpush.msra.mxu0 0.0
    %149 = vmatpush.msra.mxu0 0.0
    %150 = vmatpush.msra.mxu0 0.0
    %151 = vmatpush.msra.mxu0 0.0
    %152 = vmatpush.msra.mxu0 0.0
    %153 = vmatpush.msra.mxu0 0.0
    %154 = vmatpush.msra.mxu0 0.0
    %155 = vmatpush.msra.mxu0 %v146
    %156 = vmatpush.msra.mxu0 %v145
    %157 = vmatpush.msra.mxu0 %v144
    %158 = vmatpush.msra.mxu0 %v143
    %159 = vmatpush.msra.mxu0 %v142
    %160 = vmatpush.msra.mxu0 %v141
    %161 = vmatpush.msra.mxu0 %v140
    %162 = vmatpush.msra.mxu0 %v139
    %163 = vmatmul.f32.gmra.mxu0 %v111
    %v164 = vpop.f32.mrf.mxu0
    %v165 = vadd.f32 0.0, %v164
    %166 = vmatmul.f32.gmra.mxu0 %v114
    %v167 = vpop.f32.mrf.mxu0
    %v168 = vadd.f32 0.0, %v167
    %169 = vdwg.mxu0
    %v170 = vmul.f32 %v134, %v95
    %v171 = vmul.f32 %v137, %v95
    %v172 = vmul.f32 %v165, %v96
    %v173 = vmul.f32 %v168, %v96
    %v174 = vsub.f32 %v170, %v172
    %v175 = vsub.f32 %v171, %v173
    %v176 = vmul.f32 %v165, %v95
    %v177 = vmul.f32 %v168, %v95
    %v178 = vmul.f32 %v134, %v96
    %v179 = vmul.f32 %v137, %v96
    %v180 = vadd.f32 %v176, %v178
    %v181 = vadd.f32 %v177, %v179
    %v182 = vld [vmem:[%s7] sm:$0xff]
    %v183 = vld [vmem:[%s7 + $0x8] sm:$0xff]
    %v184 = vld [vmem:[%s7 + $0x10] sm:$0xff]
    %v185 = vld [vmem:[%s7 + $0x18] sm:$0xff]
    %v186 = vld [vmem:[%s7 + $0x20] sm:$0xff]
    %v187 = vld [vmem:[%s7 + $0x28] sm:$0xff]
    %v188 = vld [vmem:[%s7 + $0x30] sm:$0xff]
    %v189 = vld [vmem:[%s7 + $0x38] sm:$0xff]
    %190 = vmatpush.msra.mxu0 0.0
    %191 = vmatpush.msra.mxu0 0.0
    %192 = vmatpush.msra.mxu0 0.0
    %193 = vmatpush.msra.mxu0 0.0
    %194 = vmatpush.msra.mxu0 0.0
    %195 = vmatpush.msra.mxu0 0.0
    %196 = vmatpush.msra.mxu0 0.0
    %197 = vmatpush.msra.mxu0 0.0
    %198 = vmatpush.msra.mxu0 %v189
    %199 = vmatpush.msra.mxu0 %v188
    %200 = vmatpush.msra.mxu0 %v187
    %201 = vmatpush.msra.mxu0 %v186
    %202 = vmatpush.msra.mxu0 %v185
    %203 = vmatpush.msra.mxu0 %v184
    %204 = vmatpush.msra.mxu0 %v183
    %205 = vmatpush.msra.mxu0 %v182
    %206 = vmatmul.f32.gmra.mxu0 %v111
    %v207 = vpop.f32.mrf.mxu0
    %v208 = vadd.f32 0.0, %v207
    %209 = vmatmul.f32.gmra.mxu0 %v114
    %v210 = vpop.f32.mrf.mxu0
    %v211 = vadd.f32 0.0, %v210
    %212 = vdwg.mxu0
    %s213 = scalar_lea.vmem %s5, 64
    %v214 = vld [vmem:[%s213] sm:$0xff]
    %v215 = vld [vmem:[%s213 + $0x8] sm:$0xff]
    %v216 = vld [vmem:[%s213 + $0x10] sm:$0xff]
    %v217 = vld [vmem:[%s213 + $0x18] sm:$0xff]
    %v218 = vld [vmem:[%s213 + $0x20] sm:$0xff]
    %v219 = vld [vmem:[%s213 + $0x28] sm:$0xff]
    %v220 = vld [vmem:[%s213 + $0x30] sm:$0xff]
    %v221 = vld [vmem:[%s213 + $0x38] sm:$0xff]
    %222 = vmatpush.msra.mxu0 0.0
    %223 = vmatpush.msra.mxu0 0.0
    %224 = vmatpush.msra.mxu0 0.0
    %225 = vmatpush.msra.mxu0 0.0
    %226 = vmatpush.msra.mxu0 0.0
    %227 = vmatpush.msra.mxu0 0.0
    %228 = vmatpush.msra.mxu0 0.0
    %229 = vmatpush.msra.mxu0 0.0
    %230 = vmatpush.msra.mxu0 %v221
    %231 = vmatpush.msra.mxu0 %v220
    %232 = vmatpush.msra.mxu0 %v219
    %233 = vmatpush.msra.mxu0 %v218
    %234 = vmatpush.msra.mxu0 %v217
    %235 = vmatpush.msra.mxu0 %v216
    %236 = vmatpush.msra.mxu0 %v215
    %237 = vmatpush.msra.mxu0 %v214
    %238 = vmatmul.f32.gmra.mxu0 %v111
    %v239 = vpop.f32.mrf.mxu0
    %v240 = vadd.f32 0.0, %v239
    %241 = vmatmul.f32.gmra.mxu0 %v114
    %v242 = vpop.f32.mrf.mxu0
    %v243 = vadd.f32 0.0, %v242
    %244 = vdwg.mxu0
    %s245 = scalar_lea.vmem %s6, 64
    %v246 = vld [vmem:[%s245] sm:$0xff]
    %v247 = vld [vmem:[%s245 + $0x8] sm:$0xff]
    %v248 = vld [vmem:[%s245 + $0x10] sm:$0xff]
    %v249 = vld [vmem:[%s245 + $0x18] sm:$0xff]
    %v250 = vld [vmem:[%s245 + $0x20] sm:$0xff]
    %v251 = vld [vmem:[%s245 + $0x28] sm:$0xff]
    %v252 = vld [vmem:[%s245 + $0x30] sm:$0xff]
    %v253 = vld [vmem:[%s245 + $0x38] sm:$0xff]
    %254 = vmatpush.msra.mxu0 0.0
    %255 = vmatpush.msra.mxu0 0.0
    %256 = vmatpush.msra.mxu0 0.0
    %257 = vmatpush.msra.mxu0 0.0
    %258 = vmatpush.msra.mxu0 0.0
    %259 = vmatpush.msra.mxu0 0.0
    %260 = vmatpush.msra.mxu0 0.0
    %261 = vmatpush.msra.mxu0 0.0
    %262 = vmatpush.msra.mxu0 %v253
    %263 = vmatpush.msra.mxu0 %v252
    %264 = vmatpush.msra.mxu0 %v251
    %265 = vmatpush.msra.mxu0 %v250
    %266 = vmatpush.msra.mxu0 %v249
    %267 = vmatpush.msra.mxu0 %v248
    %268 = vmatpush.msra.mxu0 %v247
    %269 = vmatpush.msra.mxu0 %v246
    %270 = vmatmul.f32.gmra.mxu0 %v111
    %v271 = vpop.f32.mrf.mxu0
    %v272 = vadd.f32 0.0, %v271
    %273 = vmatmul.f32.gmra.mxu0 %v114
    %v274 = vpop.f32.mrf.mxu0
    %v275 = vadd.f32 0.0, %v274
    %276 = vdwg.mxu0
    %v277 = vmul.f32 %v240, %v95
    %v278 = vmul.f32 %v243, %v95
    %v279 = vmul.f32 %v272, %v96
    %v280 = vmul.f32 %v275, %v96
    %v281 = vsub.f32 %v277, %v279
    %v282 = vsub.f32 %v278, %v280
    %v283 = vmul.f32 %v272, %v95
    %v284 = vmul.f32 %v275, %v95
    %v285 = vmul.f32 %v240, %v96
    %v286 = vmul.f32 %v243, %v96
    %v287 = vadd.f32 %v283, %v285
    %v288 = vadd.f32 %v284, %v286
    %s289 = scalar_lea.vmem %s7, 64
    %v290 = vld [vmem:[%s289] sm:$0xff]
    %v291 = vld [vmem:[%s289 + $0x8] sm:$0xff]
    %v292 = vld [vmem:[%s289 + $0x10] sm:$0xff]
    %v293 = vld [vmem:[%s289 + $0x18] sm:$0xff]
    %v294 = vld [vmem:[%s289 + $0x20] sm:$0xff]
    %v295 = vld [vmem:[%s289 + $0x28] sm:$0xff]
    %v296 = vld [vmem:[%s289 + $0x30] sm:$0xff]
    %v297 = vld [vmem:[%s289 + $0x38] sm:$0xff]
    %298 = vmatpush.msra.mxu0 0.0
    %299 = vmatpush.msra.mxu0 0.0
    %300 = vmatpush.msra.mxu0 0.0
    %301 = vmatpush.msra.mxu0 0.0
    %302 = vmatpush.msra.mxu0 0.0
    %303 = vmatpush.msra.mxu0 0.0
    %304 = vmatpush.msra.mxu0 0.0
    %305 = vmatpush.msra.mxu0 0.0
    %306 = vmatpush.msra.mxu0 %v297
    %307 = vmatpush.msra.mxu0 %v296
    %308 = vmatpush.msra.mxu0 %v295
    %309 = vmatpush.msra.mxu0 %v294
    %310 = vmatpush.msra.mxu0 %v293
    %311 = vmatpush.msra.mxu0 %v292
    %312 = vmatpush.msra.mxu0 %v291
    %313 = vmatpush.msra.mxu0 %v290
    %314 = vmatmul.f32.gmra.mxu0 %v111
    %v315 = vpop.f32.mrf.mxu0
    %v316 = vadd.f32 0.0, %v315
    %317 = vmatmul.f32.gmra.mxu0 %v114
    %v318 = vpop.f32.mrf.mxu0
    %v319 = vadd.f32 0.0, %v318
    %320 = vdwg.mxu0
    %v321 = vld [vmem:[%s3] sm:$0xff]
    %v322 = vld [vmem:[%s3 + $0x8] sm:$0xff]
    %v323 = vld [vmem:[%s3 + $0x10] sm:$0xff]
    %v324 = vld [vmem:[%s3 + $0x18] sm:$0xff]
    %v325 = vld [vmem:[%s3 + $0x20] sm:$0xff]
    %v326 = vld [vmem:[%s3 + $0x28] sm:$0xff]
    %v327 = vld [vmem:[%s3 + $0x30] sm:$0xff]
    %v328 = vld [vmem:[%s3 + $0x38] sm:$0xff]
    %329 = vmatpush.msra.mxu0 0.0
    %330 = vmatpush.msra.mxu0 0.0
    %331 = vmatpush.msra.mxu0 0.0
    %332 = vmatpush.msra.mxu0 0.0
    %333 = vmatpush.msra.mxu0 0.0
    %334 = vmatpush.msra.mxu0 0.0
    %335 = vmatpush.msra.mxu0 0.0
    %336 = vmatpush.msra.mxu0 0.0
    %337 = vmatpush.msra.mxu0 %v328
    %338 = vmatpush.msra.mxu0 %v327
    %339 = vmatpush.msra.mxu0 %v326
    %340 = vmatpush.msra.mxu0 %v325
    %341 = vmatpush.msra.mxu0 %v324
    %342 = vmatpush.msra.mxu0 %v323
    %343 = vmatpush.msra.mxu0 %v322
    %344 = vmatpush.msra.mxu0 %v321
    %345 = vmatmul.f32.gmra.mxu0 %v111
    %v346 = vpop.f32.mrf.mxu0
    %v347 = vadd.f32 0.0, %v346
    %348 = vmatmul.f32.gmra.mxu0 %v114
    %v349 = vpop.f32.mrf.mxu0
    %v350 = vadd.f32 0.0, %v349
    %351 = vdwg.mxu0
    %v352 = vld [vmem:[%s4] sm:$0xff]
    %v353 = vld [vmem:[%s4 + $0x8] sm:$0xff]
    %v354 = vld [vmem:[%s4 + $0x10] sm:$0xff]
    %v355 = vld [vmem:[%s4 + $0x18] sm:$0xff]
    %v356 = vld [vmem:[%s4 + $0x20] sm:$0xff]
    %v357 = vld [vmem:[%s4 + $0x28] sm:$0xff]
    %v358 = vld [vmem:[%s4 + $0x30] sm:$0xff]
    %v359 = vld [vmem:[%s4 + $0x38] sm:$0xff]
    %360 = vmatpush.msra.mxu0 0.0
    %361 = vmatpush.msra.mxu0 0.0
    %362 = vmatpush.msra.mxu0 0.0
    %363 = vmatpush.msra.mxu0 0.0
    %364 = vmatpush.msra.mxu0 0.0
    %365 = vmatpush.msra.mxu0 0.0
    %366 = vmatpush.msra.mxu0 0.0
    %367 = vmatpush.msra.mxu0 0.0
    %368 = vmatpush.msra.mxu0 %v359
    %369 = vmatpush.msra.mxu0 %v358
    %370 = vmatpush.msra.mxu0 %v357
    %371 = vmatpush.msra.mxu0 %v356
    %372 = vmatpush.msra.mxu0 %v355
    %373 = vmatpush.msra.mxu0 %v354
    %374 = vmatpush.msra.mxu0 %v353
    %375 = vmatpush.msra.mxu0 %v352
    %376 = vmatmul.f32.gmra.mxu0 %v111
    %v377 = vpop.f32.mrf.mxu0
    %v378 = vadd.f32 0.0, %v377
    %379 = vmatmul.f32.gmra.mxu0 %v114
    %v380 = vpop.f32.mrf.mxu0
    %v381 = vadd.f32 0.0, %v380
    %382 = vdwg.mxu0
    %v383 = vmul.f32 %v347, %v95
    %v384 = vmul.f32 %v350, %v95
    %v385 = vmul.f32 %v378, %v96
    %v386 = vmul.f32 %v381, %v96
    %v387 = vsub.f32 %v383, %v385
    %v388 = vsub.f32 %v384, %v386
    %v389 = vmul.f32 %v378, %v95
    %v390 = vmul.f32 %v381, %v95
    %v391 = vmul.f32 %v347, %v96
    %v392 = vmul.f32 %v350, %v96
    %v393 = vadd.f32 %v389, %v391
    %v394 = vadd.f32 %v390, %v392
    %vm395 = vcmask 64512
    %v397 = vsel %vm395, %v393, 0
    %v400 = vsel %vm395, %v180, 0
    %402 = vmatpush.xpose.msra.mxu0 0.0
    %403 = vmatpush.xpose.msra.mxu0 0.0
    %404 = vmatpush.xpose.msra.mxu0 0.0
    %405 = vmatpush.xpose.msra.mxu0 0.0
    %406 = vmatpush.xpose.msra.mxu0 0.0
    %407 = vmatpush.xpose.msra.mxu0 0.0
    %408 = vmatpush.xpose.msra.mxu0 0.0
    %409 = vmatpush.xpose.msra.mxu0 0.0
    %410 = vmatpush.xpose.msra.mxu0 0.0
    %411 = vmatpush.xpose.msra.mxu0 0.0
    %412 = vmatpush.xpose.msra.mxu0 0.0
    %413 = vmatpush.xpose.msra.mxu0 0.0
    %414 = vmatpush.xpose.msra.mxu0 0.0
    %415 = vmatpush.xpose.msra.mxu0 0.0
    %416 = vmatpush.xpose.msra.mxu0 0.0
    %417 = vmatpush.xpose.msra.mxu0 %v400
    %418 = vmatmul.f32.gmra.mxu0 %v397
    %v419 = vpop.f32.mrf.mxu0
    %v420 = vadd.f32 0.0, %v419
    %421 = vdwg.mxu0
    %v423 = vsel %vm395, %v394, 0
    %v426 = vsel %vm395, %v181, 0
    %428 = vmatpush.xpose.msra.mxu0 0.0
    %429 = vmatpush.xpose.msra.mxu0 0.0
    %430 = vmatpush.xpose.msra.mxu0 0.0
    %431 = vmatpush.xpose.msra.mxu0 0.0
    %432 = vmatpush.xpose.msra.mxu0 0.0
    %433 = vmatpush.xpose.msra.mxu0 0.0
    %434 = vmatpush.xpose.msra.mxu0 0.0
    %435 = vmatpush.xpose.msra.mxu0 0.0
    %436 = vmatpush.xpose.msra.mxu0 0.0
    %437 = vmatpush.xpose.msra.mxu0 0.0
    %438 = vmatpush.xpose.msra.mxu0 0.0
    %439 = vmatpush.xpose.msra.mxu0 0.0
    %440 = vmatpush.xpose.msra.mxu0 0.0
    %441 = vmatpush.xpose.msra.mxu0 0.0
    %442 = vmatpush.xpose.msra.mxu0 0.0
    %443 = vmatpush.xpose.msra.mxu0 %v426
    %444 = vmatmul.f32.gmra.mxu0 %v423
    %v445 = vpop.f32.mrf.mxu0
    %v446 = vadd.f32 0.0, %v445
    %447 = vdwg.mxu0
    %v449 = vsel %vm395, %v387, 0
    %v452 = vsel %vm395, %v174, 0
    %454 = vmatpush.xpose.msra.mxu0 0.0
    %455 = vmatpush.xpose.msra.mxu0 0.0
    %456 = vmatpush.xpose.msra.mxu0 0.0
    %457 = vmatpush.xpose.msra.mxu0 0.0
    %458 = vmatpush.xpose.msra.mxu0 0.0
    %459 = vmatpush.xpose.msra.mxu0 0.0
    %460 = vmatpush.xpose.msra.mxu0 0.0
    %461 = vmatpush.xpose.msra.mxu0 0.0
    %462 = vmatpush.xpose.msra.mxu0 0.0
    %463 = vmatpush.xpose.msra.mxu0 0.0
    %464 = vmatpush.xpose.msra.mxu0 0.0
    %465 = vmatpush.xpose.msra.mxu0 0.0
    %466 = vmatpush.xpose.msra.mxu0 0.0
    %467 = vmatpush.xpose.msra.mxu0 0.0
    %468 = vmatpush.xpose.msra.mxu0 0.0
    %469 = vmatpush.xpose.msra.mxu0 %v452
    %470 = vmatmul.f32.gmra.mxu0 %v449
    %v471 = vpop.f32.mrf.mxu0
    %v472 = vadd.f32 %v420, %v471
    %473 = vdwg.mxu0
    %v475 = vsel %vm395, %v388, 0
    %v478 = vsel %vm395, %v175, 0
    %480 = vmatpush.xpose.msra.mxu0 0.0
    %481 = vmatpush.xpose.msra.mxu0 0.0
    %482 = vmatpush.xpose.msra.mxu0 0.0
    %483 = vmatpush.xpose.msra.mxu0 0.0
    %484 = vmatpush.xpose.msra.mxu0 0.0
    %485 = vmatpush.xpose.msra.mxu0 0.0
    %486 = vmatpush.xpose.msra.mxu0 0.0
    %487 = vmatpush.xpose.msra.mxu0 0.0
    %488 = vmatpush.xpose.msra.mxu0 0.0
    %489 = vmatpush.xpose.msra.mxu0 0.0
    %490 = vmatpush.xpose.msra.mxu0 0.0
    %491 = vmatpush.xpose.msra.mxu0 0.0
    %492 = vmatpush.xpose.msra.mxu0 0.0
    %493 = vmatpush.xpose.msra.mxu0 0.0
    %494 = vmatpush.xpose.msra.mxu0 0.0
    %495 = vmatpush.xpose.msra.mxu0 %v478
    %496 = vmatmul.f32.gmra.mxu0 %v475
    %v497 = vpop.f32.mrf.mxu0
    %v498 = vadd.f32 %v446, %v497
    %499 = vdwg.mxu0
    %v500 = vsel %vm101, 1, 0
    %vm501 = vcmp.eq.s32.totalorder %v500, 1
    %v502 = vsel %vm501, %v472, -3.4028235e+38
    %v503 = vsel %vm501, %v498, -3.4028235e+38
    %v504 = vsel %vm395, %v502, -inf
    %505 = vmax.xlane.f32.xlu0 %v504
    %v506 = vpop.xlane.xlu0 %505
    %v507 = vsel %vm395, %v503, -inf
    %508 = vmax.xlane.f32.xlu0 %v507
    %v509 = vpop.xlane.xlu0 %508
    %v510 = vsub.f32 %v502, %v506
    %v511 = vsub.f32 %v503, %v509
    %v512 = vmul.f32 %v510, 1.442695
    %v513 = vpow.pop %v512
    %v514 = vmul.f32 %v511, 1.442695
    %v515 = vpow.pop %v514
    %v516 = vsel %vm395, %v513, 0.0
    %517 = vadd.xlane.f32.xlu0 %v516
    %v518 = vpop.xlane.xlu0 %517
    %v519 = vsel %vm395, %v515, 0.0
    %520 = vadd.xlane.f32.xlu0 %v519
    %v521 = vpop.xlane.xlu0 %520
    %v522 = vrcp.pop %v518
    %v523 = vrcp.pop %v521
    %v524 = vmul.f32 %v513, %v522
    %v525 = vmul.f32 %v515, %v523
    %v527 = vsel %vm395, %v524, 0
    %529 = vmatpush.msra.mxu0 0.0
    %530 = vmatpush.msra.mxu0 0.0
    %531 = vmatpush.msra.mxu0 0.0
    %532 = vmatpush.msra.mxu0 0.0
    %533 = vmatpush.msra.mxu0 0.0
    %534 = vmatpush.msra.mxu0 0.0
    %535 = vmatpush.msra.mxu0 0.0
    %536 = vmatpush.msra.mxu0 0.0
    %537 = vmatpush.msra.mxu0 0.0
    %538 = vmatpush.msra.mxu0 0.0
    %539 = vmatpush.msra.mxu0 0.0
    %540 = vmatpush.msra.mxu0 0.0
    %541 = vmatpush.msra.mxu0 0.0
    %542 = vmatpush.msra.mxu0 0.0
    %543 = vmatpush.msra.mxu0 0.0
    %544 = vmatpush.msra.mxu0 %v208
    %545 = vmatmul.f32.gmra.mxu0 %v527
    %v546 = vpop.f32.mrf.mxu0
    %v547 = vadd.f32 0.0, %v546
    %548 = vdwg.mxu0
    %v550 = vsel %vm395, %v525, 0
    %552 = vmatpush.msra.mxu0 0.0
    %553 = vmatpush.msra.mxu0 0.0
    %554 = vmatpush.msra.mxu0 0.0
    %555 = vmatpush.msra.mxu0 0.0
    %556 = vmatpush.msra.mxu0 0.0
    %557 = vmatpush.msra.mxu0 0.0
    %558 = vmatpush.msra.mxu0 0.0
    %559 = vmatpush.msra.mxu0 0.0
    %560 = vmatpush.msra.mxu0 0.0
    %561 = vmatpush.msra.mxu0 0.0
    %562 = vmatpush.msra.mxu0 0.0
    %563 = vmatpush.msra.mxu0 0.0
    %564 = vmatpush.msra.mxu0 0.0
    %565 = vmatpush.msra.mxu0 0.0
    %566 = vmatpush.msra.mxu0 0.0
    %567 = vmatpush.msra.mxu0 %v211
    %568 = vmatmul.f32.gmra.mxu0 %v550
    %v569 = vpop.f32.mrf.mxu0
    %v570 = vadd.f32 0.0, %v569
    %571 = vdwg.mxu0
    %v572 = vld [vmem:[%s8] sm:$0xff]
    %v573 = vld [vmem:[%s8 + $0x8] sm:$0xff]
    %s574 = scalar_lea.vmem %s3, 64
    %v575 = vld [vmem:[%s574] sm:$0xff]
    %v576 = vld [vmem:[%s574 + $0x8] sm:$0xff]
    %v577 = vld [vmem:[%s574 + $0x10] sm:$0xff]
    %v578 = vld [vmem:[%s574 + $0x18] sm:$0xff]
    %v579 = vld [vmem:[%s574 + $0x20] sm:$0xff]
    %v580 = vld [vmem:[%s574 + $0x28] sm:$0xff]
    %v581 = vld [vmem:[%s574 + $0x30] sm:$0xff]
    %v582 = vld [vmem:[%s574 + $0x38] sm:$0xff]
    %583 = vmatpush.msra.mxu0 0.0
    %584 = vmatpush.msra.mxu0 0.0
    %585 = vmatpush.msra.mxu0 0.0
    %586 = vmatpush.msra.mxu0 0.0
    %587 = vmatpush.msra.mxu0 0.0
    %588 = vmatpush.msra.mxu0 0.0
    %589 = vmatpush.msra.mxu0 0.0
    %590 = vmatpush.msra.mxu0 0.0
    %591 = vmatpush.msra.mxu0 %v582
    %592 = vmatpush.msra.mxu0 %v581
    %593 = vmatpush.msra.mxu0 %v580
    %594 = vmatpush.msra.mxu0 %v579
    %595 = vmatpush.msra.mxu0 %v578
    %596 = vmatpush.msra.mxu0 %v577
    %597 = vmatpush.msra.mxu0 %v576
    %598 = vmatpush.msra.mxu0 %v575
    %599 = vmatmul.f32.gmra.mxu0 %v111
    %v600 = vpop.f32.mrf.mxu0
    %v601 = vadd.f32 0.0, %v600
    %602 = vmatmul.f32.gmra.mxu0 %v114
    %v603 = vpop.f32.mrf.mxu0
    %v604 = vadd.f32 0.0, %v603
    %605 = vdwg.mxu0
    %s606 = scalar_lea.vmem %s4, 64
    %v607 = vld [vmem:[%s606] sm:$0xff]
    %v608 = vld [vmem:[%s606 + $0x8] sm:$0xff]
    %v609 = vld [vmem:[%s606 + $0x10] sm:$0xff]
    %v610 = vld [vmem:[%s606 + $0x18] sm:$0xff]
    %v611 = vld [vmem:[%s606 + $0x20] sm:$0xff]
    %v612 = vld [vmem:[%s606 + $0x28] sm:$0xff]
    %v613 = vld [vmem:[%s606 + $0x30] sm:$0xff]
    %v614 = vld [vmem:[%s606 + $0x38] sm:$0xff]
    %615 = vmatpush.msra.mxu0 0.0
    %616 = vmatpush.msra.mxu0 0.0
    %617 = vmatpush.msra.mxu0 0.0
    %618 = vmatpush.msra.mxu0 0.0
    %619 = vmatpush.msra.mxu0 0.0
    %620 = vmatpush.msra.mxu0 0.0
    %621 = vmatpush.msra.mxu0 0.0
    %622 = vmatpush.msra.mxu0 0.0
    %623 = vmatpush.msra.mxu0 %v614
    %624 = vmatpush.msra.mxu0 %v613
    %625 = vmatpush.msra.mxu0 %v612
    %626 = vmatpush.msra.mxu0 %v611
    %627 = vmatpush.msra.mxu0 %v610
    %628 = vmatpush.msra.mxu0 %v609
    %629 = vmatpush.msra.mxu0 %v608
    %630 = vmatpush.msra.mxu0 %v607
    %631 = vmatmul.f32.gmra.mxu0 %v111
    %v632 = vpop.f32.mrf.mxu0
    %v633 = vadd.f32 0.0, %v632
    %634 = vmatmul.f32.gmra.mxu0 %v114
    %v635 = vpop.f32.mrf.mxu0
    %v636 = vadd.f32 0.0, %v635
    %637 = vdwg.mxu0
    %v638 = vmul.f32 %v601, %v95
    %v639 = vmul.f32 %v604, %v95
    %v640 = vmul.f32 %v633, %v96
    %v641 = vmul.f32 %v636, %v96
    %v642 = vsub.f32 %v638, %v640
    %v643 = vsub.f32 %v639, %v641
    %v644 = vmul.f32 %v633, %v95
    %v645 = vmul.f32 %v636, %v95
    %v646 = vmul.f32 %v601, %v96
    %v647 = vmul.f32 %v604, %v96
    %v648 = vadd.f32 %v644, %v646
    %v649 = vadd.f32 %v645, %v647
    %v651 = vsel %vm395, %v648, 0
    %653 = vmatpush.xpose.msra.mxu0 0.0
    %654 = vmatpush.xpose.msra.mxu0 0.0
    %655 = vmatpush.xpose.msra.mxu0 0.0
    %656 = vmatpush.xpose.msra.mxu0 0.0
    %657 = vmatpush.xpose.msra.mxu0 0.0
    %658 = vmatpush.xpose.msra.mxu0 0.0
    %659 = vmatpush.xpose.msra.mxu0 0.0
    %660 = vmatpush.xpose.msra.mxu0 0.0
    %661 = vmatpush.xpose.msra.mxu0 0.0
    %662 = vmatpush.xpose.msra.mxu0 0.0
    %663 = vmatpush.xpose.msra.mxu0 0.0
    %664 = vmatpush.xpose.msra.mxu0 0.0
    %665 = vmatpush.xpose.msra.mxu0 0.0
    %666 = vmatpush.xpose.msra.mxu0 0.0
    %667 = vmatpush.xpose.msra.mxu0 0.0
    %668 = vmatpush.xpose.msra.mxu0 %v400
    %669 = vmatmul.f32.gmra.mxu0 %v651
    %v670 = vpop.f32.mrf.mxu0
    %v671 = vadd.f32 0.0, %v670
    %672 = vdwg.mxu0
    %v674 = vsel %vm395, %v649, 0
    %676 = vmatpush.xpose.msra.mxu0 0.0
    %677 = vmatpush.xpose.msra.mxu0 0.0
    %678 = vmatpush.xpose.msra.mxu0 0.0
    %679 = vmatpush.xpose.msra.mxu0 0.0
    %680 = vmatpush.xpose.msra.mxu0 0.0
    %681 = vmatpush.xpose.msra.mxu0 0.0
    %682 = vmatpush.xpose.msra.mxu0 0.0
    %683 = vmatpush.xpose.msra.mxu0 0.0
    %684 = vmatpush.xpose.msra.mxu0 0.0
    %685 = vmatpush.xpose.msra.mxu0 0.0
    %686 = vmatpush.xpose.msra.mxu0 0.0
    %687 = vmatpush.xpose.msra.mxu0 0.0
    %688 = vmatpush.xpose.msra.mxu0 0.0
    %689 = vmatpush.xpose.msra.mxu0 0.0
    %690 = vmatpush.xpose.msra.mxu0 0.0
    %691 = vmatpush.xpose.msra.mxu0 %v426
    %692 = vmatmul.f32.gmra.mxu0 %v674
    %v693 = vpop.f32.mrf.mxu0
    %v694 = vadd.f32 0.0, %v693
    %695 = vdwg.mxu0
    %v697 = vsel %vm395, %v642, 0
    %699 = vmatpush.xpose.msra.mxu0 0.0
    %700 = vmatpush.xpose.msra.mxu0 0.0
    %701 = vmatpush.xpose.msra.mxu0 0.0
    %702 = vmatpush.xpose.msra.mxu0 0.0
    %703 = vmatpush.xpose.msra.mxu0 0.0
    %704 = vmatpush.xpose.msra.mxu0 0.0
    %705 = vmatpush.xpose.msra.mxu0 0.0
    %706 = vmatpush.xpose.msra.mxu0 0.0
    %707 = vmatpush.xpose.msra.mxu0 0.0
    %708 = vmatpush.xpose.msra.mxu0 0.0
    %709 = vmatpush.xpose.msra.mxu0 0.0
    %710 = vmatpush.xpose.msra.mxu0 0.0
    %711 = vmatpush.xpose.msra.mxu0 0.0
    %712 = vmatpush.xpose.msra.mxu0 0.0
    %713 = vmatpush.xpose.msra.mxu0 0.0
    %714 = vmatpush.xpose.msra.mxu0 %v452
    %715 = vmatmul.f32.gmra.mxu0 %v697
    %v716 = vpop.f32.mrf.mxu0
    %v717 = vadd.f32 %v671, %v716
    %718 = vdwg.mxu0
    %v720 = vsel %vm395, %v643, 0
    %722 = vmatpush.xpose.msra.mxu0 0.0
    %723 = vmatpush.xpose.msra.mxu0 0.0
    %724 = vmatpush.xpose.msra.mxu0 0.0
    %725 = vmatpush.xpose.msra.mxu0 0.0
    %726 = vmatpush.xpose.msra.mxu0 0.0
    %727 = vmatpush.xpose.msra.mxu0 0.0
    %728 = vmatpush.xpose.msra.mxu0 0.0
    %729 = vmatpush.xpose.msra.mxu0 0.0
    %730 = vmatpush.xpose.msra.mxu0 0.0
    %731 = vmatpush.xpose.msra.mxu0 0.0
    %732 = vmatpush.xpose.msra.mxu0 0.0
    %733 = vmatpush.xpose.msra.mxu0 0.0
    %734 = vmatpush.xpose.msra.mxu0 0.0
    %735 = vmatpush.xpose.msra.mxu0 0.0
    %736 = vmatpush.xpose.msra.mxu0 0.0
    %737 = vmatpush.xpose.msra.mxu0 %v478
    %738 = vmatmul.f32.gmra.mxu0 %v720
    %v739 = vpop.f32.mrf.mxu0
    %v740 = vadd.f32 %v694, %v739
    %741 = vdwg.mxu0
    %v742 = vsel %vm501, %v717, -3.4028235e+38
    %v743 = vsel %vm501, %v740, -3.4028235e+38
    %v744 = vsel %vm395, %v742, -inf
    %745 = vmax.xlane.f32.xlu0 %v744
    %v746 = vpop.xlane.xlu0 %745
    %v747 = vsel %vm395, %v743, -inf
    %748 = vmax.xlane.f32.xlu0 %v747
    %v749 = vpop.xlane.xlu0 %748
    %v750 = vsub.f32 %v742, %v746
    %v751 = vsub.f32 %v743, %v749
    %v752 = vmul.f32 %v750, 1.442695
    %v753 = vpow.pop %v752
    %v754 = vmul.f32 %v751, 1.442695
    %v755 = vpow.pop %v754
    %v756 = vsel %vm395, %v753, 0.0
    %757 = vadd.xlane.f32.xlu0 %v756
    %v758 = vpop.xlane.xlu0 %757
    %v759 = vsel %vm395, %v755, 0.0
    %760 = vadd.xlane.f32.xlu0 %v759
    %v761 = vpop.xlane.xlu0 %760
    %v762 = vrcp.pop %v758
    %v763 = vrcp.pop %v761
    %v764 = vmul.f32 %v753, %v762
    %v765 = vmul.f32 %v755, %v763
    %v767 = vsel %vm395, %v764, 0
    %769 = vmatpush.msra.mxu0 0.0
    %770 = vmatpush.msra.mxu0 0.0
    %771 = vmatpush.msra.mxu0 0.0
    %772 = vmatpush.msra.mxu0 0.0
    %773 = vmatpush.msra.mxu0 0.0
    %774 = vmatpush.msra.mxu0 0.0
    %775 = vmatpush.msra.mxu0 0.0
    %776 = vmatpush.msra.mxu0 0.0
    %777 = vmatpush.msra.mxu0 0.0
    %778 = vmatpush.msra.mxu0 0.0
    %779 = vmatpush.msra.mxu0 0.0
    %780 = vmatpush.msra.mxu0 0.0
    %781 = vmatpush.msra.mxu0 0.0
    %782 = vmatpush.msra.mxu0 0.0
    %783 = vmatpush.msra.mxu0 0.0
    %784 = vmatpush.msra.mxu0 %v208
    %785 = vmatmul.f32.gmra.mxu0 %v767
    %v786 = vpop.f32.mrf.mxu0
    %v787 = vadd.f32 0.0, %v786
    %788 = vdwg.mxu0
    %v790 = vsel %vm395, %v765, 0
    %792 = vmatpush.msra.mxu0 0.0
    %793 = vmatpush.msra.mxu0 0.0
    %794 = vmatpush.msra.mxu0 0.0
    %795 = vmatpush.msra.mxu0 0.0
    %796 = vmatpush.msra.mxu0 0.0
    %797 = vmatpush.msra.mxu0 0.0
    %798 = vmatpush.msra.mxu0 0.0
    %799 = vmatpush.msra.mxu0 0.0
    %800 = vmatpush.msra.mxu0 0.0
    %801 = vmatpush.msra.mxu0 0.0
    %802 = vmatpush.msra.mxu0 0.0
    %803 = vmatpush.msra.mxu0 0.0
    %804 = vmatpush.msra.mxu0 0.0
    %805 = vmatpush.msra.mxu0 0.0
    %806 = vmatpush.msra.mxu0 0.0
    %807 = vmatpush.msra.mxu0 %v211
    %808 = vmatmul.f32.gmra.mxu0 %v790
    %v809 = vpop.f32.mrf.mxu0
    %v810 = vadd.f32 0.0, %v809
    %811 = vdwg.mxu0
    %s812 = scalar_lea.vmem %s8, 16
    %v813 = vld [vmem:[%s812] sm:$0xff]
    %v814 = vld [vmem:[%s812 + $0x8] sm:$0xff]
    %vm815 = vcmask 130048
    %v817 = vsel %vm815, %v787, 0
    %v820 = vsel %vm815, %v810, 0
    %822 = vmatpush.msra.mxu0 0.0
    %823 = vmatpush.msra.mxu0 0.0
    %824 = vmatpush.msra.mxu0 0.0
    %825 = vmatpush.msra.mxu0 0.0
    %826 = vmatpush.msra.mxu0 0.0
    %827 = vmatpush.msra.mxu0 0.0
    %828 = vmatpush.msra.mxu0 0.0
    %829 = vmatpush.msra.mxu0 0.0
    %830 = vmatpush.msra.mxu0 0.0
    %831 = vmatpush.msra.mxu0 0.0
    %832 = vmatpush.msra.mxu0 0.0
    %833 = vmatpush.msra.mxu0 0.0
    %834 = vmatpush.msra.mxu0 0.0
    %835 = vmatpush.msra.mxu0 0.0
    %836 = vmatpush.msra.mxu0 %v814
    %837 = vmatpush.msra.mxu0 %v813
    %838 = vmatmul.f32.gmra.mxu0 %v817
    %v839 = vpop.f32.mrf.mxu0
    %v840 = vadd.f32 0.0, %v839
    %841 = vmatmul.f32.gmra.mxu0 %v820
    %v842 = vpop.f32.mrf.mxu0
    %v843 = vadd.f32 0.0, %v842
    %844 = vdwg.mxu0
    %v846 = vsel %vm815, %v547, 0
    %v849 = vsel %vm815, %v570, 0
    %851 = vmatpush.msra.mxu0 0.0
    %852 = vmatpush.msra.mxu0 0.0
    %853 = vmatpush.msra.mxu0 0.0
    %854 = vmatpush.msra.mxu0 0.0
    %855 = vmatpush.msra.mxu0 0.0
    %856 = vmatpush.msra.mxu0 0.0
    %857 = vmatpush.msra.mxu0 0.0
    %858 = vmatpush.msra.mxu0 0.0
    %859 = vmatpush.msra.mxu0 0.0
    %860 = vmatpush.msra.mxu0 0.0
    %861 = vmatpush.msra.mxu0 0.0
    %862 = vmatpush.msra.mxu0 0.0
    %863 = vmatpush.msra.mxu0 0.0
    %864 = vmatpush.msra.mxu0 0.0
    %865 = vmatpush.msra.mxu0 %v573
    %866 = vmatpush.msra.mxu0 %v572
    %867 = vmatmul.f32.gmra.mxu0 %v846
    %v868 = vpop.f32.mrf.mxu0
    %v869 = vadd.f32 %v840, %v868
    %870 = vmatmul.f32.gmra.mxu0 %v849
    %v871 = vpop.f32.mrf.mxu0
    %v872 = vadd.f32 %v843, %v871
    %873 = vdwg.mxu0
    %s874 = scalar_lea.vmem %s3, 128
    %v875 = vld [vmem:[%s874] sm:$0xff]
    %v876 = vld [vmem:[%s874 + $0x8] sm:$0xff]
    %v877 = vld [vmem:[%s874 + $0x10] sm:$0xff]
    %v878 = vld [vmem:[%s874 + $0x18] sm:$0xff]
    %v879 = vld [vmem:[%s874 + $0x20] sm:$0xff]
    %v880 = vld [vmem:[%s874 + $0x28] sm:$0xff]
    %v881 = vld [vmem:[%s874 + $0x30] sm:$0xff]
    %v882 = vld [vmem:[%s874 + $0x38] sm:$0xff]
    %883 = vmatpush.msra.mxu0 0.0
    %884 = vmatpush.msra.mxu0 0.0
    %885 = vmatpush.msra.mxu0 0.0
    %886 = vmatpush.msra.mxu0 0.0
    %887 = vmatpush.msra.mxu0 0.0
    %888 = vmatpush.msra.mxu0 0.0
    %889 = vmatpush.msra.mxu0 0.0
    %890 = vmatpush.msra.mxu0 0.0
    %891 = vmatpush.msra.mxu0 %v882
    %892 = vmatpush.msra.mxu0 %v881
    %893 = vmatpush.msra.mxu0 %v880
    %894 = vmatpush.msra.mxu0 %v879
    %895 = vmatpush.msra.mxu0 %v878
    %896 = vmatpush.msra.mxu0 %v877
    %897 = vmatpush.msra.mxu0 %v876
    %898 = vmatpush.msra.mxu0 %v875
    %899 = vmatmul.f32.gmra.mxu0 %v111
    %v900 = vpop.f32.mrf.mxu0
    %v901 = vadd.f32 0.0, %v900
    %902 = vmatmul.f32.gmra.mxu0 %v114
    %v903 = vpop.f32.mrf.mxu0
    %v904 = vadd.f32 0.0, %v903
    %905 = vdwg.mxu0
    %s906 = scalar_lea.vmem %s4, 128
    %v907 = vld [vmem:[%s906] sm:$0xff]
    %v908 = vld [vmem:[%s906 + $0x8] sm:$0xff]
    %v909 = vld [vmem:[%s906 + $0x10] sm:$0xff]
    %v910 = vld [vmem:[%s906 + $0x18] sm:$0xff]
    %v911 = vld [vmem:[%s906 + $0x20] sm:$0xff]
    %v912 = vld [vmem:[%s906 + $0x28] sm:$0xff]
    %v913 = vld [vmem:[%s906 + $0x30] sm:$0xff]
    %v914 = vld [vmem:[%s906 + $0x38] sm:$0xff]
    %915 = vmatpush.msra.mxu0 0.0
    %916 = vmatpush.msra.mxu0 0.0
    %917 = vmatpush.msra.mxu0 0.0
    %918 = vmatpush.msra.mxu0 0.0
    %919 = vmatpush.msra.mxu0 0.0
    %920 = vmatpush.msra.mxu0 0.0
    %921 = vmatpush.msra.mxu0 0.0
    %922 = vmatpush.msra.mxu0 0.0
    %923 = vmatpush.msra.mxu0 %v914
    %924 = vmatpush.msra.mxu0 %v913
    %925 = vmatpush.msra.mxu0 %v912
    %926 = vmatpush.msra.mxu0 %v911
    %927 = vmatpush.msra.mxu0 %v910
    %928 = vmatpush.msra.mxu0 %v909
    %929 = vmatpush.msra.mxu0 %v908
    %930 = vmatpush.msra.mxu0 %v907
    %931 = vmatmul.f32.gmra.mxu0 %v111
    %v932 = vpop.f32.mrf.mxu0
    %v933 = vadd.f32 0.0, %v932
    %934 = vmatmul.f32.gmra.mxu0 %v114
    %v935 = vpop.f32.mrf.mxu0
    %v936 = vadd.f32 0.0, %v935
    %937 = vdwg.mxu0
    %v938 = vmul.f32 %v901, %v95
    %v939 = vmul.f32 %v904, %v95
    %v940 = vmul.f32 %v933, %v96
    %v941 = vmul.f32 %v936, %v96
    %v942 = vsub.f32 %v938, %v940
    %v943 = vsub.f32 %v939, %v941
    %v944 = vmul.f32 %v933, %v95
    %v945 = vmul.f32 %v936, %v95
    %v946 = vmul.f32 %v901, %v96
    %v947 = vmul.f32 %v904, %v96
    %v948 = vadd.f32 %v944, %v946
    %v949 = vadd.f32 %v945, %v947
    %v951 = vsel %vm395, %v948, 0
    %v954 = vsel %vm395, %v287, 0
    %956 = vmatpush.xpose.msra.mxu0 0.0
    %957 = vmatpush.xpose.msra.mxu0 0.0
    %958 = vmatpush.xpose.msra.mxu0 0.0
    %959 = vmatpush.xpose.msra.mxu0 0.0
    %960 = vmatpush.xpose.msra.mxu0 0.0
    %961 = vmatpush.xpose.msra.mxu0 0.0
    %962 = vmatpush.xpose.msra.mxu0 0.0
    %963 = vmatpush.xpose.msra.mxu0 0.0
    %964 = vmatpush.xpose.msra.mxu0 0.0
    %965 = vmatpush.xpose.msra.mxu0 0.0
    %966 = vmatpush.xpose.msra.mxu0 0.0
    %967 = vmatpush.xpose.msra.mxu0 0.0
    %968 = vmatpush.xpose.msra.mxu0 0.0
    %969 = vmatpush.xpose.msra.mxu0 0.0
    %970 = vmatpush.xpose.msra.mxu0 0.0
    %971 = vmatpush.xpose.msra.mxu0 %v954
    %972 = vmatmul.f32.gmra.mxu0 %v951
    %v973 = vpop.f32.mrf.mxu0
    %v974 = vadd.f32 0.0, %v973
    %975 = vdwg.mxu0
    %v977 = vsel %vm395, %v949, 0
    %v980 = vsel %vm395, %v288, 0
    %982 = vmatpush.xpose.msra.mxu0 0.0
    %983 = vmatpush.xpose.msra.mxu0 0.0
    %984 = vmatpush.xpose.msra.mxu0 0.0
    %985 = vmatpush.xpose.msra.mxu0 0.0
    %986 = vmatpush.xpose.msra.mxu0 0.0
    %987 = vmatpush.xpose.msra.mxu0 0.0
    %988 = vmatpush.xpose.msra.mxu0 0.0
    %989 = vmatpush.xpose.msra.mxu0 0.0
    %990 = vmatpush.xpose.msra.mxu0 0.0
    %991 = vmatpush.xpose.msra.mxu0 0.0
    %992 = vmatpush.xpose.msra.mxu0 0.0
    %993 = vmatpush.xpose.msra.mxu0 0.0
    %994 = vmatpush.xpose.msra.mxu0 0.0
    %995 = vmatpush.xpose.msra.mxu0 0.0
    %996 = vmatpush.xpose.msra.mxu0 0.0
    %997 = vmatpush.xpose.msra.mxu0 %v980
    %998 = vmatmul.f32.gmra.mxu0 %v977
    %v999 = vpop.f32.mrf.mxu0
    %v1000 = vadd.f32 0.0, %v999
    %1001 = vdwg.mxu0
    %v1003 = vsel %vm395, %v942, 0
    %v1006 = vsel %vm395, %v281, 0
    %1008 = vmatpush.xpose.msra.mxu0 0.0
    %1009 = vmatpush.xpose.msra.mxu0 0.0
    %1010 = vmatpush.xpose.msra.mxu0 0.0
    %1011 = vmatpush.xpose.msra.mxu0 0.0
    %1012 = vmatpush.xpose.msra.mxu0 0.0
    %1013 = vmatpush.xpose.msra.mxu0 0.0
    %1014 = vmatpush.xpose.msra.mxu0 0.0
    %1015 = vmatpush.xpose.msra.mxu0 0.0
    %1016 = vmatpush.xpose.msra.mxu0 0.0
    %1017 = vmatpush.xpose.msra.mxu0 0.0
    %1018 = vmatpush.xpose.msra.mxu0 0.0
    %1019 = vmatpush.xpose.msra.mxu0 0.0
    %1020 = vmatpush.xpose.msra.mxu0 0.0
    %1021 = vmatpush.xpose.msra.mxu0 0.0
    %1022 = vmatpush.xpose.msra.mxu0 0.0
    %1023 = vmatpush.xpose.msra.mxu0 %v1006
    %1024 = vmatmul.f32.gmra.mxu0 %v1003
    %v1025 = vpop.f32.mrf.mxu0
    %v1026 = vadd.f32 %v974, %v1025
    %1027 = vdwg.mxu0
    %v1029 = vsel %vm395, %v943, 0
    %v1032 = vsel %vm395, %v282, 0
    %1034 = vmatpush.xpose.msra.mxu0 0.0
    %1035 = vmatpush.xpose.msra.mxu0 0.0
    %1036 = vmatpush.xpose.msra.mxu0 0.0
    %1037 = vmatpush.xpose.msra.mxu0 0.0
    %1038 = vmatpush.xpose.msra.mxu0 0.0
    %1039 = vmatpush.xpose.msra.mxu0 0.0
    %1040 = vmatpush.xpose.msra.mxu0 0.0
    %1041 = vmatpush.xpose.msra.mxu0 0.0
    %1042 = vmatpush.xpose.msra.mxu0 0.0
    %1043 = vmatpush.xpose.msra.mxu0 0.0
    %1044 = vmatpush.xpose.msra.mxu0 0.0
    %1045 = vmatpush.xpose.msra.mxu0 0.0
    %1046 = vmatpush.xpose.msra.mxu0 0.0
    %1047 = vmatpush.xpose.msra.mxu0 0.0
    %1048 = vmatpush.xpose.msra.mxu0 0.0
    %1049 = vmatpush.xpose.msra.mxu0 %v1032
    %1050 = vmatmul.f32.gmra.mxu0 %v1029
    %v1051 = vpop.f32.mrf.mxu0
    %v1052 = vadd.f32 %v1000, %v1051
    %1053 = vdwg.mxu0
    %v1054 = vsel %vm501, %v1026, -3.4028235e+38
    %v1055 = vsel %vm501, %v1052, -3.4028235e+38
    %v1056 = vsel %vm395, %v1054, -inf
    %1057 = vmax.xlane.f32.xlu0 %v1056
    %v1058 = vpop.xlane.xlu0 %1057
    %v1059 = vsel %vm395, %v1055, -inf
    %1060 = vmax.xlane.f32.xlu0 %v1059
    %v1061 = vpop.xlane.xlu0 %1060
    %v1062 = vsub.f32 %v1054, %v1058
    %v1063 = vsub.f32 %v1055, %v1061
    %v1064 = vmul.f32 %v1062, 1.442695
    %v1065 = vpow.pop %v1064
    %v1066 = vmul.f32 %v1063, 1.442695
    %v1067 = vpow.pop %v1066
    %v1068 = vsel %vm395, %v1065, 0.0
    %1069 = vadd.xlane.f32.xlu0 %v1068
    %v1070 = vpop.xlane.xlu0 %1069
    %v1071 = vsel %vm395, %v1067, 0.0
    %1072 = vadd.xlane.f32.xlu0 %v1071
    %v1073 = vpop.xlane.xlu0 %1072
    %v1074 = vrcp.pop %v1070
    %v1075 = vrcp.pop %v1073
    %v1076 = vmul.f32 %v1065, %v1074
    %v1077 = vmul.f32 %v1067, %v1075
    %v1079 = vsel %vm395, %v1076, 0
    %1081 = vmatpush.msra.mxu0 0.0
    %1082 = vmatpush.msra.mxu0 0.0
    %1083 = vmatpush.msra.mxu0 0.0
    %1084 = vmatpush.msra.mxu0 0.0
    %1085 = vmatpush.msra.mxu0 0.0
    %1086 = vmatpush.msra.mxu0 0.0
    %1087 = vmatpush.msra.mxu0 0.0
    %1088 = vmatpush.msra.mxu0 0.0
    %1089 = vmatpush.msra.mxu0 0.0
    %1090 = vmatpush.msra.mxu0 0.0
    %1091 = vmatpush.msra.mxu0 0.0
    %1092 = vmatpush.msra.mxu0 0.0
    %1093 = vmatpush.msra.mxu0 0.0
    %1094 = vmatpush.msra.mxu0 0.0
    %1095 = vmatpush.msra.mxu0 0.0
    %1096 = vmatpush.msra.mxu0 %v316
    %1097 = vmatmul.f32.gmra.mxu0 %v1079
    %v1098 = vpop.f32.mrf.mxu0
    %v1099 = vadd.f32 0.0, %v1098
    %1100 = vdwg.mxu0
    %v1102 = vsel %vm395, %v1077, 0
    %1104 = vmatpush.msra.mxu0 0.0
    %1105 = vmatpush.msra.mxu0 0.0
    %1106 = vmatpush.msra.mxu0 0.0
    %1107 = vmatpush.msra.mxu0 0.0
    %1108 = vmatpush.msra.mxu0 0.0
    %1109 = vmatpush.msra.mxu0 0.0
    %1110 = vmatpush.msra.mxu0 0.0
    %1111 = vmatpush.msra.mxu0 0.0
    %1112 = vmatpush.msra.mxu0 0.0
    %1113 = vmatpush.msra.mxu0 0.0
    %1114 = vmatpush.msra.mxu0 0.0
    %1115 = vmatpush.msra.mxu0 0.0
    %1116 = vmatpush.msra.mxu0 0.0
    %1117 = vmatpush.msra.mxu0 0.0
    %1118 = vmatpush.msra.mxu0 0.0
    %1119 = vmatpush.msra.mxu0 %v319
    %1120 = vmatmul.f32.gmra.mxu0 %v1102
    %v1121 = vpop.f32.mrf.mxu0
    %v1122 = vadd.f32 0.0, %v1121
    %1123 = vdwg.mxu0
    %s1124 = scalar_lea.vmem %s8, 32
    %v1125 = vld [vmem:[%s1124] sm:$0xff]
    %v1126 = vld [vmem:[%s1124 + $0x8] sm:$0xff]
    %v1128 = vsel %vm815, %v1099, 0
    %v1131 = vsel %vm815, %v1122, 0
    %1133 = vmatpush.msra.mxu0 0.0
    %1134 = vmatpush.msra.mxu0 0.0
    %1135 = vmatpush.msra.mxu0 0.0
    %1136 = vmatpush.msra.mxu0 0.0
    %1137 = vmatpush.msra.mxu0 0.0
    %1138 = vmatpush.msra.mxu0 0.0
    %1139 = vmatpush.msra.mxu0 0.0
    %1140 = vmatpush.msra.mxu0 0.0
    %1141 = vmatpush.msra.mxu0 0.0
    %1142 = vmatpush.msra.mxu0 0.0
    %1143 = vmatpush.msra.mxu0 0.0
    %1144 = vmatpush.msra.mxu0 0.0
    %1145 = vmatpush.msra.mxu0 0.0
    %1146 = vmatpush.msra.mxu0 0.0
    %1147 = vmatpush.msra.mxu0 %v1126
    %1148 = vmatpush.msra.mxu0 %v1125
    %1149 = vmatmul.f32.gmra.mxu0 %v1128
    %v1150 = vpop.f32.mrf.mxu0
    %v1151 = vadd.f32 0.0, %v1150
    %1152 = vmatmul.f32.gmra.mxu0 %v1131
    %v1153 = vpop.f32.mrf.mxu0
    %v1154 = vadd.f32 0.0, %v1153
    %1155 = vdwg.mxu0
    %v1156 = vadd.f32 %v869, %v1151
    %v1157 = vadd.f32 %v872, %v1154
    %s1158 = scalar_lea.vmem %s3, 192
    %v1159 = vld [vmem:[%s1158] sm:$0xff]
    %v1160 = vld [vmem:[%s1158 + $0x8] sm:$0xff]
    %v1161 = vld [vmem:[%s1158 + $0x10] sm:$0xff]
    %v1162 = vld [vmem:[%s1158 + $0x18] sm:$0xff]
    %v1163 = vld [vmem:[%s1158 + $0x20] sm:$0xff]
    %v1164 = vld [vmem:[%s1158 + $0x28] sm:$0xff]
    %v1165 = vld [vmem:[%s1158 + $0x30] sm:$0xff]
    %v1166 = vld [vmem:[%s1158 + $0x38] sm:$0xff]
    %1167 = vmatpush.msra.mxu0 0.0
    %1168 = vmatpush.msra.mxu0 0.0
    %1169 = vmatpush.msra.mxu0 0.0
    %1170 = vmatpush.msra.mxu0 0.0
    %1171 = vmatpush.msra.mxu0 0.0
    %1172 = vmatpush.msra.mxu0 0.0
    %1173 = vmatpush.msra.mxu0 0.0
    %1174 = vmatpush.msra.mxu0 0.0
    %1175 = vmatpush.msra.mxu0 %v1166
    %1176 = vmatpush.msra.mxu0 %v1165
    %1177 = vmatpush.msra.mxu0 %v1164
    %1178 = vmatpush.msra.mxu0 %v1163
    %1179 = vmatpush.msra.mxu0 %v1162
    %1180 = vmatpush.msra.mxu0 %v1161
    %1181 = vmatpush.msra.mxu0 %v1160
    %1182 = vmatpush.msra.mxu0 %v1159
    %1183 = vmatmul.f32.gmra.mxu0 %v111
    %v1184 = vpop.f32.mrf.mxu0
    %v1185 = vadd.f32 0.0, %v1184
    %1186 = vmatmul.f32.gmra.mxu0 %v114
    %v1187 = vpop.f32.mrf.mxu0
    %v1188 = vadd.f32 0.0, %v1187
    %1189 = vdwg.mxu0
    %s1190 = scalar_lea.vmem %s4, 192
    %v1191 = vld [vmem:[%s1190] sm:$0xff]
    %v1192 = vld [vmem:[%s1190 + $0x8] sm:$0xff]
    %v1193 = vld [vmem:[%s1190 + $0x10] sm:$0xff]
    %v1194 = vld [vmem:[%s1190 + $0x18] sm:$0xff]
    %v1195 = vld [vmem:[%s1190 + $0x20] sm:$0xff]
    %v1196 = vld [vmem:[%s1190 + $0x28] sm:$0xff]
    %v1197 = vld [vmem:[%s1190 + $0x30] sm:$0xff]
    %v1198 = vld [vmem:[%s1190 + $0x38] sm:$0xff]
    %1199 = vmatpush.msra.mxu0 0.0
    %1200 = vmatpush.msra.mxu0 0.0
    %1201 = vmatpush.msra.mxu0 0.0
    %1202 = vmatpush.msra.mxu0 0.0
    %1203 = vmatpush.msra.mxu0 0.0
    %1204 = vmatpush.msra.mxu0 0.0
    %1205 = vmatpush.msra.mxu0 0.0
    %1206 = vmatpush.msra.mxu0 0.0
    %1207 = vmatpush.msra.mxu0 %v1198
    %1208 = vmatpush.msra.mxu0 %v1197
    %1209 = vmatpush.msra.mxu0 %v1196
    %1210 = vmatpush.msra.mxu0 %v1195
    %1211 = vmatpush.msra.mxu0 %v1194
    %1212 = vmatpush.msra.mxu0 %v1193
    %1213 = vmatpush.msra.mxu0 %v1192
    %1214 = vmatpush.msra.mxu0 %v1191
    %1215 = vmatmul.f32.gmra.mxu0 %v111
    %v1216 = vpop.f32.mrf.mxu0
    %v1217 = vadd.f32 0.0, %v1216
    %1218 = vmatmul.f32.gmra.mxu0 %v114
    %v1219 = vpop.f32.mrf.mxu0
    %v1220 = vadd.f32 0.0, %v1219
    %1221 = vdwg.mxu0
    %v1222 = vmul.f32 %v1185, %v95
    %v1223 = vmul.f32 %v1188, %v95
    %v1224 = vmul.f32 %v1217, %v96
    %v1225 = vmul.f32 %v1220, %v96
    %v1226 = vsub.f32 %v1222, %v1224
    %v1227 = vsub.f32 %v1223, %v1225
    %v1228 = vmul.f32 %v1217, %v95
    %v1229 = vmul.f32 %v1220, %v95
    %v1230 = vmul.f32 %v1185, %v96
    %v1231 = vmul.f32 %v1188, %v96
    %v1232 = vadd.f32 %v1228, %v1230
    %v1233 = vadd.f32 %v1229, %v1231
    %v1235 = vsel %vm395, %v1232, 0
    %1237 = vmatpush.xpose.msra.mxu0 0.0
    %1238 = vmatpush.xpose.msra.mxu0 0.0
    %1239 = vmatpush.xpose.msra.mxu0 0.0
    %1240 = vmatpush.xpose.msra.mxu0 0.0
    %1241 = vmatpush.xpose.msra.mxu0 0.0
    %1242 = vmatpush.xpose.msra.mxu0 0.0
    %1243 = vmatpush.xpose.msra.mxu0 0.0
    %1244 = vmatpush.xpose.msra.mxu0 0.0
    %1245 = vmatpush.xpose.msra.mxu0 0.0
    %1246 = vmatpush.xpose.msra.mxu0 0.0
    %1247 = vmatpush.xpose.msra.mxu0 0.0
    %1248 = vmatpush.xpose.msra.mxu0 0.0
    %1249 = vmatpush.xpose.msra.mxu0 0.0
    %1250 = vmatpush.xpose.msra.mxu0 0.0
    %1251 = vmatpush.xpose.msra.mxu0 0.0
    %1252 = vmatpush.xpose.msra.mxu0 %v954
    %1253 = vmatmul.f32.gmra.mxu0 %v1235
    %v1254 = vpop.f32.mrf.mxu0
    %v1255 = vadd.f32 0.0, %v1254
    %1256 = vdwg.mxu0
    %v1258 = vsel %vm395, %v1233, 0
    %1260 = vmatpush.xpose.msra.mxu0 0.0
    %1261 = vmatpush.xpose.msra.mxu0 0.0
    %1262 = vmatpush.xpose.msra.mxu0 0.0
    %1263 = vmatpush.xpose.msra.mxu0 0.0
    %1264 = vmatpush.xpose.msra.mxu0 0.0
    %1265 = vmatpush.xpose.msra.mxu0 0.0
    %1266 = vmatpush.xpose.msra.mxu0 0.0
    %1267 = vmatpush.xpose.msra.mxu0 0.0
    %1268 = vmatpush.xpose.msra.mxu0 0.0
    %1269 = vmatpush.xpose.msra.mxu0 0.0
    %1270 = vmatpush.xpose.msra.mxu0 0.0
    %1271 = vmatpush.xpose.msra.mxu0 0.0
    %1272 = vmatpush.xpose.msra.mxu0 0.0
    %1273 = vmatpush.xpose.msra.mxu0 0.0
    %1274 = vmatpush.xpose.msra.mxu0 0.0
    %1275 = vmatpush.xpose.msra.mxu0 %v980
    %1276 = vmatmul.f32.gmra.mxu0 %v1258
    %v1277 = vpop.f32.mrf.mxu0
    %v1278 = vadd.f32 0.0, %v1277
    %1279 = vdwg.mxu0
    %v1281 = vsel %vm395, %v1226, 0
    %1283 = vmatpush.xpose.msra.mxu0 0.0
    %1284 = vmatpush.xpose.msra.mxu0 0.0
    %1285 = vmatpush.xpose.msra.mxu0 0.0
    %1286 = vmatpush.xpose.msra.mxu0 0.0
    %1287 = vmatpush.xpose.msra.mxu0 0.0
    %1288 = vmatpush.xpose.msra.mxu0 0.0
    %1289 = vmatpush.xpose.msra.mxu0 0.0
    %1290 = vmatpush.xpose.msra.mxu0 0.0
    %1291 = vmatpush.xpose.msra.mxu0 0.0
    %1292 = vmatpush.xpose.msra.mxu0 0.0
    %1293 = vmatpush.xpose.msra.mxu0 0.0
    %1294 = vmatpush.xpose.msra.mxu0 0.0
    %1295 = vmatpush.xpose.msra.mxu0 0.0
    %1296 = vmatpush.xpose.msra.mxu0 0.0
    %1297 = vmatpush.xpose.msra.mxu0 0.0
    %1298 = vmatpush.xpose.msra.mxu0 %v1006
    %1299 = vmatmul.f32.gmra.mxu0 %v1281
    %v1300 = vpop.f32.mrf.mxu0
    %v1301 = vadd.f32 %v1255, %v1300
    %1302 = vdwg.mxu0
    %v1304 = vsel %vm395, %v1227, 0
    %1306 = vmatpush.xpose.msra.mxu0 0.0
    %1307 = vmatpush.xpose.msra.mxu0 0.0
    %1308 = vmatpush.xpose.msra.mxu0 0.0
    %1309 = vmatpush.xpose.msra.mxu0 0.0
    %1310 = vmatpush.xpose.msra.mxu0 0.0
    %1311 = vmatpush.xpose.msra.mxu0 0.0
    %1312 = vmatpush.xpose.msra.mxu0 0.0
    %1313 = vmatpush.xpose.msra.mxu0 0.0
    %1314 = vmatpush.xpose.msra.mxu0 0.0
    %1315 = vmatpush.xpose.msra.mxu0 0.0
    %1316 = vmatpush.xpose.msra.mxu0 0.0
    %1317 = vmatpush.xpose.msra.mxu0 0.0
    %1318 = vmatpush.xpose.msra.mxu0 0.0
    %1319 = vmatpush.xpose.msra.mxu0 0.0
    %1320 = vmatpush.xpose.msra.mxu0 0.0
    %1321 = vmatpush.xpose.msra.mxu0 %v1032
    %1322 = vmatmul.f32.gmra.mxu0 %v1304
    %v1323 = vpop.f32.mrf.mxu0
    %v1324 = vadd.f32 %v1278, %v1323
    %1325 = vdwg.mxu0
    %v1326 = vsel %vm501, %v1301, -3.4028235e+38
    %v1327 = vsel %vm501, %v1324, -3.4028235e+38
    %v1328 = vsel %vm395, %v1326, -inf
    %1329 = vmax.xlane.f32.xlu0 %v1328
    %v1330 = vpop.xlane.xlu0 %1329
    %v1331 = vsel %vm395, %v1327, -inf
    %1332 = vmax.xlane.f32.xlu0 %v1331
    %v1333 = vpop.xlane.xlu0 %1332
    %v1334 = vsub.f32 %v1326, %v1330
    %v1335 = vsub.f32 %v1327, %v1333
    %v1336 = vmul.f32 %v1334, 1.442695
    %v1337 = vpow.pop %v1336
    %v1338 = vmul.f32 %v1335, 1.442695
    %v1339 = vpow.pop %v1338
    %v1340 = vsel %vm395, %v1337, 0.0
    %1341 = vadd.xlane.f32.xlu0 %v1340
    %v1342 = vpop.xlane.xlu0 %1341
    %v1343 = vsel %vm395, %v1339, 0.0
    %1344 = vadd.xlane.f32.xlu0 %v1343
    %v1345 = vpop.xlane.xlu0 %1344
    %v1346 = vrcp.pop %v1342
    %v1347 = vrcp.pop %v1345
    %v1348 = vmul.f32 %v1337, %v1346
    %v1349 = vmul.f32 %v1339, %v1347
    %v1351 = vsel %vm395, %v1348, 0
    %1353 = vmatpush.msra.mxu0 0.0
    %1354 = vmatpush.msra.mxu0 0.0
    %1355 = vmatpush.msra.mxu0 0.0
    %1356 = vmatpush.msra.mxu0 0.0
    %1357 = vmatpush.msra.mxu0 0.0
    %1358 = vmatpush.msra.mxu0 0.0
    %1359 = vmatpush.msra.mxu0 0.0
    %1360 = vmatpush.msra.mxu0 0.0
    %1361 = vmatpush.msra.mxu0 0.0
    %1362 = vmatpush.msra.mxu0 0.0
    %1363 = vmatpush.msra.mxu0 0.0
    %1364 = vmatpush.msra.mxu0 0.0
    %1365 = vmatpush.msra.mxu0 0.0
    %1366 = vmatpush.msra.mxu0 0.0
    %1367 = vmatpush.msra.mxu0 0.0
    %1368 = vmatpush.msra.mxu0 %v316
    %1369 = vmatmul.f32.gmra.mxu0 %v1351
    %v1370 = vpop.f32.mrf.mxu0
    %v1371 = vadd.f32 0.0, %v1370
    %1372 = vdwg.mxu0
    %v1374 = vsel %vm395, %v1349, 0
    %1376 = vmatpush.msra.mxu0 0.0
    %1377 = vmatpush.msra.mxu0 0.0
    %1378 = vmatpush.msra.mxu0 0.0
    %1379 = vmatpush.msra.mxu0 0.0
    %1380 = vmatpush.msra.mxu0 0.0
    %1381 = vmatpush.msra.mxu0 0.0
    %1382 = vmatpush.msra.mxu0 0.0
    %1383 = vmatpush.msra.mxu0 0.0
    %1384 = vmatpush.msra.mxu0 0.0
    %1385 = vmatpush.msra.mxu0 0.0
    %1386 = vmatpush.msra.mxu0 0.0
    %1387 = vmatpush.msra.mxu0 0.0
    %1388 = vmatpush.msra.mxu0 0.0
    %1389 = vmatpush.msra.mxu0 0.0
    %1390 = vmatpush.msra.mxu0 0.0
    %1391 = vmatpush.msra.mxu0 %v319
    %1392 = vmatmul.f32.gmra.mxu0 %v1374
    %v1393 = vpop.f32.mrf.mxu0
    %v1394 = vadd.f32 0.0, %v1393
    %1395 = vdwg.mxu0
    %s1396 = scalar_lea.vmem %s8, 48
    %v1397 = vld [vmem:[%s1396] sm:$0xff]
    %v1398 = vld [vmem:[%s1396 + $0x8] sm:$0xff]
    %v1400 = vsel %vm815, %v1371, 0
    %v1403 = vsel %vm815, %v1394, 0
    %1405 = vmatpush.msra.mxu0 0.0
    %1406 = vmatpush.msra.mxu0 0.0
    %1407 = vmatpush.msra.mxu0 0.0
    %1408 = vmatpush.msra.mxu0 0.0
    %1409 = vmatpush.msra.mxu0 0.0
    %1410 = vmatpush.msra.mxu0 0.0
    %1411 = vmatpush.msra.mxu0 0.0
    %1412 = vmatpush.msra.mxu0 0.0
    %1413 = vmatpush.msra.mxu0 0.0
    %1414 = vmatpush.msra.mxu0 0.0
    %1415 = vmatpush.msra.mxu0 0.0
    %1416 = vmatpush.msra.mxu0 0.0
    %1417 = vmatpush.msra.mxu0 0.0
    %1418 = vmatpush.msra.mxu0 0.0
    %1419 = vmatpush.msra.mxu0 %v1398
    %1420 = vmatpush.msra.mxu0 %v1397
    %1421 = vmatmul.f32.gmra.mxu0 %v1400
    %v1422 = vpop.f32.mrf.mxu0
    %v1423 = vadd.f32 0.0, %v1422
    %1424 = vmatmul.f32.gmra.mxu0 %v1403
    %v1425 = vpop.f32.mrf.mxu0
    %v1426 = vadd.f32 0.0, %v1425
    %1427 = vdwg.mxu0
    %v1428 = vadd.f32 %v1156, %v1423
    %v1429 = vadd.f32 %v1157, %v1426
    %v1430 = vadd.f32 %v45, %v1428
    %v1431 = vadd.f32 %v46, %v1429
    %v1432 = vmul.f32 %v1430, %v1430
    %v1433 = vmul.f32 %v1431, %v1431
    %v1434 = vsel %vm49, %v1432, 0.0
    %1435 = vadd.xlane.f32.xlu0 %v1434
    %v1436 = vpop.xlane.xlu0 %1435
    %v1437 = vsel %vm49, %v1433, 0.0
    %1438 = vadd.xlane.f32.xlu0 %v1437
    %v1439 = vpop.xlane.xlu0 %1438
    %v1440 = vmul.f32 %v1436, %v62
    %v1441 = vmul.f32 %v1439, %v62
    %v1442 = vadd.f32 %v1440, 1e-05
    %v1443 = vadd.f32 %v1441, 1e-05
    %v1444 = vrsqrt.pop %v1442
    %v1445 = vmul.f32 %v1444, %v1442
    %v1446 = vmul.f32 %v1445, %v1444
    %v1447 = vmul.f32 0.5, %v1446
    %v1448 = vsub.f32 1.5, %v1447
    %v1449 = vmul.f32 %v1444, %v1448
    %vm1450 = vweird.f32 %v1442
    %vm1451 = vweird.f32 %v1444
    %vm1452 = vmor %vm1450, %vm1451
    %v1453 = vsel %vm1452, %v1444, %v1449
    %v1454 = vrsqrt.pop %v1443
    %v1455 = vmul.f32 %v1454, %v1443
    %v1456 = vmul.f32 %v1455, %v1454
    %v1457 = vmul.f32 0.5, %v1456
    %v1458 = vsub.f32 1.5, %v1457
    %v1459 = vmul.f32 %v1454, %v1458
    %vm1460 = vweird.f32 %v1443
    %vm1461 = vweird.f32 %v1454
    %vm1462 = vmor %vm1460, %vm1461
    %v1463 = vsel %vm1462, %v1454, %v1459
    %v1464 = vmul.f32 %v1430, %v1453
    %v1465 = vmul.f32 %v1431, %v1463
    %v1466 = vld [vmem:[%s2] sm:$0x1]
    %v1468 = vperm.slane %v1466, 0
    %v1470 = vmul.f32 %v1464, %v1468
    %v1471 = vmul.f32 %v1465, %v1468
    %v1472 = vld [vmem:[%s11] sm:$0xff]
    %v1473 = vld [vmem:[%s11 + $0x8] sm:$0xff]
    %v1474 = vld [vmem:[%s11 + $0x10] sm:$0xff]
    %v1475 = vld [vmem:[%s11 + $0x18] sm:$0xff]
    %v1476 = vld [vmem:[%s11 + $0x20] sm:$0xff]
    %v1477 = vld [vmem:[%s11 + $0x28] sm:$0xff]
    %v1478 = vld [vmem:[%s11 + $0x30] sm:$0xff]
    %v1479 = vld [vmem:[%s11 + $0x38] sm:$0xff]
    %v1480 = vld [vmem:[%s11 + $0x40] sm:$0xff]
    %v1481 = vld [vmem:[%s11 + $0x48] sm:$0xff]
    %v1482 = vld [vmem:[%s11 + $0x50] sm:$0xff]
    %v1483 = vld [vmem:[%s11 + $0x58] sm:$0xff]
    %v1484 = vld [vmem:[%s11 + $0x60] sm:$0xff]
    %v1485 = vld [vmem:[%s11 + $0x68] sm:$0xff]
    %v1486 = vld [vmem:[%s11 + $0x70] sm:$0xff]
    %v1487 = vld [vmem:[%s11 + $0x78] sm:$0xff]
    %v1488 = vld [vmem:[%s11 + $0x80] sm:$0xff]
    %v1489 = vld [vmem:[%s11 + $0x88] sm:$0xff]
    %v1490 = vld [vmem:[%s11 + $0x90] sm:$0xff]
    %v1491 = vld [vmem:[%s11 + $0x98] sm:$0xff]
    %v1492 = vld [vmem:[%s11 + $0xa0] sm:$0xff]
    %v1493 = vld [vmem:[%s11 + $0xa8] sm:$0xff]
    %v1494 = vld [vmem:[%s11 + $0xb0] sm:$0xff]
    %v1495 = vld [vmem:[%s11 + $0xb8] sm:$0xff]
    %v1496 = vld [vmem:[%s11 + $0xc0] sm:$0xff]
    %v1497 = vld [vmem:[%s11 + $0xc8] sm:$0xff]
    %v1498 = vld [vmem:[%s11 + $0xd0] sm:$0xff]
    %v1499 = vld [vmem:[%s11 + $0xd8] sm:$0xff]
    %v1500 = vld [vmem:[%s11 + $0xe0] sm:$0xff]
    %v1501 = vld [vmem:[%s11 + $0xe8] sm:$0xff]
    %v1502 = vld [vmem:[%s11 + $0xf0] sm:$0xff]
    %v1503 = vld [vmem:[%s11 + $0xf8] sm:$0xff]
    %v1505 = vsel %vm49, %v1470, 0
    %v1508 = vsel %vm49, %v1471, 0
    %1510 = vmatpush.msra.mxu0 0.0
    %1511 = vmatpush.msra.mxu0 0.0
    %1512 = vmatpush.msra.mxu0 0.0
    %1513 = vmatpush.msra.mxu0 0.0
    %1514 = vmatpush.msra.mxu0 0.0
    %1515 = vmatpush.msra.mxu0 0.0
    %1516 = vmatpush.msra.mxu0 0.0
    %1517 = vmatpush.msra.mxu0 0.0
    %1518 = vmatpush.msra.mxu0 %v1500
    %1519 = vmatpush.msra.mxu0 %v1496
    %1520 = vmatpush.msra.mxu0 %v1492
    %1521 = vmatpush.msra.mxu0 %v1488
    %1522 = vmatpush.msra.mxu0 %v1484
    %1523 = vmatpush.msra.mxu0 %v1480
    %1524 = vmatpush.msra.mxu0 %v1476
    %1525 = vmatpush.msra.mxu0 %v1472
    %1526 = vmatmul.f32.gmra.mxu0 %v1505
    %v1527 = vpop.f32.mrf.mxu0
    %v1528 = vadd.f32 0.0, %v1527
    %1529 = vmatmul.f32.gmra.mxu0 %v1508
    %v1530 = vpop.f32.mrf.mxu0
    %v1531 = vadd.f32 0.0, %v1530
    %1532 = vdwg.mxu0
    %1533 = vmatpush.msra.mxu0 0.0
    %1534 = vmatpush.msra.mxu0 0.0
    %1535 = vmatpush.msra.mxu0 0.0
    %1536 = vmatpush.msra.mxu0 0.0
    %1537 = vmatpush.msra.mxu0 0.0
    %1538 = vmatpush.msra.mxu0 0.0
    %1539 = vmatpush.msra.mxu0 0.0
    %1540 = vmatpush.msra.mxu0 0.0
    %1541 = vmatpush.msra.mxu0 %v1501
    %1542 = vmatpush.msra.mxu0 %v1497
    %1543 = vmatpush.msra.mxu0 %v1493
    %1544 = vmatpush.msra.mxu0 %v1489
    %1545 = vmatpush.msra.mxu0 %v1485
    %1546 = vmatpush.msra.mxu0 %v1481
    %1547 = vmatpush.msra.mxu0 %v1477
    %1548 = vmatpush.msra.mxu0 %v1473
    %1549 = vmatmul.f32.gmra.mxu0 %v1505
    %v1550 = vpop.f32.mrf.mxu0
    %v1551 = vadd.f32 0.0, %v1550
    %1552 = vmatmul.f32.gmra.mxu0 %v1508
    %v1553 = vpop.f32.mrf.mxu0
    %v1554 = vadd.f32 0.0, %v1553
    %1555 = vdwg.mxu0
    %1556 = vmatpush.msra.mxu0 0.0
    %1557 = vmatpush.msra.mxu0 0.0
    %1558 = vmatpush.msra.mxu0 0.0
    %1559 = vmatpush.msra.mxu0 0.0
    %1560 = vmatpush.msra.mxu0 0.0
    %1561 = vmatpush.msra.mxu0 0.0
    %1562 = vmatpush.msra.mxu0 0.0
    %1563 = vmatpush.msra.mxu0 0.0
    %1564 = vmatpush.msra.mxu0 %v1502
    %1565 = vmatpush.msra.mxu0 %v1498
    %1566 = vmatpush.msra.mxu0 %v1494
    %1567 = vmatpush.msra.mxu0 %v1490
    %1568 = vmatpush.msra.mxu0 %v1486
    %1569 = vmatpush.msra.mxu0 %v1482
    %1570 = vmatpush.msra.mxu0 %v1478
    %1571 = vmatpush.msra.mxu0 %v1474
    %1572 = vmatmul.f32.gmra.mxu0 %v1505
    %v1573 = vpop.f32.mrf.mxu0
    %v1574 = vadd.f32 0.0, %v1573
    %1575 = vmatmul.f32.gmra.mxu0 %v1508
    %v1576 = vpop.f32.mrf.mxu0
    %v1577 = vadd.f32 0.0, %v1576
    %1578 = vdwg.mxu0
    %1579 = vmatpush.msra.mxu0 0.0
    %1580 = vmatpush.msra.mxu0 0.0
    %1581 = vmatpush.msra.mxu0 0.0
    %1582 = vmatpush.msra.mxu0 0.0
    %1583 = vmatpush.msra.mxu0 0.0
    %1584 = vmatpush.msra.mxu0 0.0
    %1585 = vmatpush.msra.mxu0 0.0
    %1586 = vmatpush.msra.mxu0 0.0
    %1587 = vmatpush.msra.mxu0 %v1503
    %1588 = vmatpush.msra.mxu0 %v1499
    %1589 = vmatpush.msra.mxu0 %v1495
    %1590 = vmatpush.msra.mxu0 %v1491
    %1591 = vmatpush.msra.mxu0 %v1487
    %1592 = vmatpush.msra.mxu0 %v1483
    %1593 = vmatpush.msra.mxu0 %v1479
    %1594 = vmatpush.msra.mxu0 %v1475
    %1595 = vmatmul.f32.gmra.mxu0 %v1505
    %v1596 = vpop.f32.mrf.mxu0
    %v1597 = vadd.f32 0.0, %v1596
    %1598 = vmatmul.f32.gmra.mxu0 %v1508
    %v1599 = vpop.f32.mrf.mxu0
    %v1600 = vadd.f32 0.0, %v1599
    %1601 = vdwg.mxu0
    %v1602 = vxor.u32 %v1528, 2147483648
    %v1603 = vxor.u32 %v1551, 2147483648
    %v1604 = vxor.u32 %v1531, 2147483648
    %v1605 = vxor.u32 %v1554, 2147483648
    %v1606 = vmul.f32 %v1602, 1.442695
    %v1607 = vpow.pop %v1606
    %v1608 = vmul.f32 %v1603, 1.442695
    %v1609 = vpow.pop %v1608
    %v1610 = vmul.f32 %v1604, 1.442695
    %v1611 = vpow.pop %v1610
    %v1612 = vmul.f32 %v1605, 1.442695
    %v1613 = vpow.pop %v1612
    %v1614 = vadd.f32 %v1607, 1.0
    %v1615 = vadd.f32 %v1609, 1.0
    %v1616 = vadd.f32 %v1611, 1.0
    %v1617 = vadd.f32 %v1613, 1.0
    %v1618 = vrcp.pop %v1614
    %v1619 = vmul.f32 %v1614, %v1618
    %v1620 = vsub.f32 1.0, %v1619
    %v1621 = vmul.f32 %v1618, %v1620
    %v1622 = vadd.f32 %v1618, %v1621
    %vm1623 = vweird.f32 %v1614
    %vm1624 = vweird.f32 %v1618
    %vm1625 = vmor %vm1623, %vm1624
    %v1626 = vsel %vm1625, %v1618, %v1622
    %v1627 = vand.u32 2147483647, %v1614
    %vm1628 = vcmp.eq.f32.partialorder %v1627, 8.507059e+37
    %v1629 = vand.u32 %v1614, 2147483648
    %v1630 = vor.u32 1.1754944e-38, %v1629
    %v1631 = vsel %vm1628, %v1630, %v1626
    %v1632 = vmul.f32 1.0, %v1631
    %v1633 = vrcp.pop %v1615
    %v1634 = vmul.f32 %v1615, %v1633
    %v1635 = vsub.f32 1.0, %v1634
    %v1636 = vmul.f32 %v1633, %v1635
    %v1637 = vadd.f32 %v1633, %v1636
    %vm1638 = vweird.f32 %v1615
    %vm1639 = vweird.f32 %v1633
    %vm1640 = vmor %vm1638, %vm1639
    %v1641 = vsel %vm1640, %v1633, %v1637
    %v1642 = vand.u32 2147483647, %v1615
    %vm1643 = vcmp.eq.f32.partialorder %v1642, 8.507059e+37
    %v1644 = vand.u32 %v1615, 2147483648
    %v1645 = vor.u32 1.1754944e-38, %v1644
    %v1646 = vsel %vm1643, %v1645, %v1641
    %v1647 = vmul.f32 1.0, %v1646
    %v1648 = vrcp.pop %v1616
    %v1649 = vmul.f32 %v1616, %v1648
    %v1650 = vsub.f32 1.0, %v1649
    %v1651 = vmul.f32 %v1648, %v1650
    %v1652 = vadd.f32 %v1648, %v1651
    %vm1653 = vweird.f32 %v1616
    %vm1654 = vweird.f32 %v1648
    %vm1655 = vmor %vm1653, %vm1654
    %v1656 = vsel %vm1655, %v1648, %v1652
    %v1657 = vand.u32 2147483647, %v1616
    %vm1658 = vcmp.eq.f32.partialorder %v1657, 8.507059e+37
    %v1659 = vand.u32 %v1616, 2147483648
    %v1660 = vor.u32 1.1754944e-38, %v1659
    %v1661 = vsel %vm1658, %v1660, %v1656
    %v1662 = vmul.f32 1.0, %v1661
    %v1663 = vrcp.pop %v1617
    %v1664 = vmul.f32 %v1617, %v1663
    %v1665 = vsub.f32 1.0, %v1664
    %v1666 = vmul.f32 %v1663, %v1665
    %v1667 = vadd.f32 %v1663, %v1666
    %vm1668 = vweird.f32 %v1617
    %vm1669 = vweird.f32 %v1663
    %vm1670 = vmor %vm1668, %vm1669
    %v1671 = vsel %vm1670, %v1663, %v1667
    %v1672 = vand.u32 2147483647, %v1617
    %vm1673 = vcmp.eq.f32.partialorder %v1672, 8.507059e+37
    %v1674 = vand.u32 %v1617, 2147483648
    %v1675 = vor.u32 1.1754944e-38, %v1674
    %v1676 = vsel %vm1673, %v1675, %v1671
    %v1677 = vmul.f32 1.0, %v1676
    %v1678 = vmul.f32 %v1528, %v1632
    %v1679 = vmul.f32 %v1551, %v1647
    %v1680 = vmul.f32 %v1531, %v1662
    %v1681 = vmul.f32 %v1554, %v1677
    %v1682 = vmul.f32 %v1678, %v1574
    %v1683 = vmul.f32 %v1679, %v1597
    %v1684 = vmul.f32 %v1680, %v1577
    %v1685 = vmul.f32 %v1681, %v1600
    %v1686 = vld [vmem:[%s12] sm:$0xff]
    %v1687 = vld [vmem:[%s12 + $0x8] sm:$0xff]
    %v1688 = vld [vmem:[%s12 + $0x10] sm:$0xff]
    %v1689 = vld [vmem:[%s12 + $0x18] sm:$0xff]
    %v1690 = vld [vmem:[%s12 + $0x20] sm:$0xff]
    %v1691 = vld [vmem:[%s12 + $0x28] sm:$0xff]
    %v1692 = vld [vmem:[%s12 + $0x30] sm:$0xff]
    %v1693 = vld [vmem:[%s12 + $0x38] sm:$0xff]
    %v1694 = vld [vmem:[%s12 + $0x40] sm:$0xff]
    %v1695 = vld [vmem:[%s12 + $0x48] sm:$0xff]
    %v1696 = vld [vmem:[%s12 + $0x50] sm:$0xff]
    %v1697 = vld [vmem:[%s12 + $0x58] sm:$0xff]
    %v1698 = vld [vmem:[%s12 + $0x60] sm:$0xff]
    %v1699 = vld [vmem:[%s12 + $0x68] sm:$0xff]
    %v1700 = vld [vmem:[%s12 + $0x70] sm:$0xff]
    %v1701 = vld [vmem:[%s12 + $0x78] sm:$0xff]
    %v1702 = vld [vmem:[%s12 + $0x80] sm:$0xff]
    %v1703 = vld [vmem:[%s12 + $0x88] sm:$0xff]
    %v1704 = vld [vmem:[%s12 + $0x90] sm:$0xff]
    %v1705 = vld [vmem:[%s12 + $0x98] sm:$0xff]
    %v1706 = vld [vmem:[%s12 + $0xa0] sm:$0xff]
    %v1707 = vld [vmem:[%s12 + $0xa8] sm:$0xff]
    %v1708 = vld [vmem:[%s12 + $0xb0] sm:$0xff]
    %v1709 = vld [vmem:[%s12 + $0xb8] sm:$0xff]
    %v1710 = vld [vmem:[%s12 + $0xc0] sm:$0xff]
    %v1711 = vld [vmem:[%s12 + $0xc8] sm:$0xff]
    %v1712 = vld [vmem:[%s12 + $0xd0] sm:$0xff]
    %v1713 = vld [vmem:[%s12 + $0xd8] sm:$0xff]
    %v1714 = vld [vmem:[%s12 + $0xe0] sm:$0xff]
    %v1715 = vld [vmem:[%s12 + $0xe8] sm:$0xff]
    %v1716 = vld [vmem:[%s12 + $0xf0] sm:$0xff]
    %v1717 = vld [vmem:[%s12 + $0xf8] sm:$0xff]
    %1718 = vmatpush.msra.mxu0 %v1701
    %1719 = vmatpush.msra.mxu0 %v1700
    %1720 = vmatpush.msra.mxu0 %v1699
    %1721 = vmatpush.msra.mxu0 %v1698
    %1722 = vmatpush.msra.mxu0 %v1697
    %1723 = vmatpush.msra.mxu0 %v1696
    %1724 = vmatpush.msra.mxu0 %v1695
    %1725 = vmatpush.msra.mxu0 %v1694
    %1726 = vmatpush.msra.mxu0 %v1693
    %1727 = vmatpush.msra.mxu0 %v1692
    %1728 = vmatpush.msra.mxu0 %v1691
    %1729 = vmatpush.msra.mxu0 %v1690
    %1730 = vmatpush.msra.mxu0 %v1689
    %1731 = vmatpush.msra.mxu0 %v1688
    %1732 = vmatpush.msra.mxu0 %v1687
    %1733 = vmatpush.msra.mxu0 %v1686
    %1734 = vmatmul.f32.gmra.mxu0 %v1682
    %v1735 = vpop.f32.mrf.mxu0
    %v1736 = vadd.f32 0.0, %v1735
    %1737 = vmatmul.f32.gmra.mxu0 %v1684
    %v1738 = vpop.f32.mrf.mxu0
    %v1739 = vadd.f32 0.0, %v1738
    %1740 = vdwg.mxu0
    %1741 = vmatpush.msra.mxu0 %v1717
    %1742 = vmatpush.msra.mxu0 %v1716
    %1743 = vmatpush.msra.mxu0 %v1715
    %1744 = vmatpush.msra.mxu0 %v1714
    %1745 = vmatpush.msra.mxu0 %v1713
    %1746 = vmatpush.msra.mxu0 %v1712
    %1747 = vmatpush.msra.mxu0 %v1711
    %1748 = vmatpush.msra.mxu0 %v1710
    %1749 = vmatpush.msra.mxu0 %v1709
    %1750 = vmatpush.msra.mxu0 %v1708
    %1751 = vmatpush.msra.mxu0 %v1707
    %1752 = vmatpush.msra.mxu0 %v1706
    %1753 = vmatpush.msra.mxu0 %v1705
    %1754 = vmatpush.msra.mxu0 %v1704
    %1755 = vmatpush.msra.mxu0 %v1703
    %1756 = vmatpush.msra.mxu0 %v1702
    %1757 = vmatmul.f32.gmra.mxu0 %v1683
    %v1758 = vpop.f32.mrf.mxu0
    %v1759 = vadd.f32 %v1736, %v1758
    %1760 = vmatmul.f32.gmra.mxu0 %v1685
    %v1761 = vpop.f32.mrf.mxu0
    %v1762 = vadd.f32 %v1739, %v1761
    %1763 = vdwg.mxu0
    %v1764 = vadd.f32 %v1430, %v1759
    %v1765 = vadd.f32 %v1431, %v1762
    %1766 = vst.msk [vmem:[#allocation2] sm:$0xff] %vm49, %v1764
    %1767 = vst.msk [vmem:[#allocation2 + $0x8] sm:$0xff] %vm49, %v1765
    // Predicated region
    $region54: #{transformer_block.1} parent=1 // pred_check
      _
    $region55: #{transformer_block.1} parent=1 // pred_check_branch
      %1769 = sbr.rel (0) target = $region57
    $region56: #{transformer_block.1} parent=1 // pred_region
      %1771 = vsyncadd [#allocation3], 0
      %s1772 = sshll.u32 [#allocation2], 4
      %s1773 = int_to_ptr.vmem [resolvable:$true] %s1772
      %s1774 = sshll.u32 %s13, 4
      %s1775 = int_to_ptr.hbm [resolvable:$true] %s1774
      %1780 = dma.vmem_to_hbm [thread:$0]  %s1773, 256, %s1775, [#allocation3], 128, 128, 8
    $region57: #{transformer_block.1} parent=1 // pred_fallthru
      _
    // Predicated region
    $region58: #{transformer_block.1} parent=1 // pred_check
      _
    $region59: #{transformer_block.1} parent=1 // pred_check_branch
      %1782 = sbr.rel (0) target = $region61
    $region60: #{transformer_block.1} parent=1 // pred_region
      %1784 = dma.done [#allocation3], 256
    $region61: #{transformer_block.1} parent=1 // pred_fallthru
      _
    %1785 = vsyncpa [#allocation3], 1

</llo_original>
